<compile_context>
chip_gen: v6e
topology: v6e:2x2x1
jax: 0.10.0
libtpu: 0.0.40
codegen_flags: <defaults>
</compile_context>

<pallas_src>
import jax
import jax.numpy as jnp
import numpy as np
from jax import lax
from jax.experimental import pallas as pl
from jax.experimental.pallas import tpu as pltpu

_LANES = 128  # edge-axis tile width (lane width); also the padding quantum


def _round_up(x, m):
    return (x + m - 1) // m * m


# ----------------------------------------------------------------------------
# Fused Pallas kernel: SAGE layer1 -> ReLU -> SAGE layer2 -> edge dot scores
# One grid step produces one 128-lane tile of edge scores.
# ----------------------------------------------------------------------------
def _fused_sage_predict_kernel(b_ref, x_ref, invd_ref,
                               ws1_ref, wn1_ref, b1_ref,
                               ws2_ref, wn2_ref, b2_ref,
                               selu_ref, selv_ref, o_ref):
    # bf16 0/1 adjacency -> f32 (values exact); f32 accumulation everywhere.
    b = b_ref[...].astype(jnp.float32)        # (N, N), B[v, u] = 1 iff edge u -> v
    x = x_ref[...]                            # (N, Fin) f32
    invd = invd_ref[...]                      # (N, 1)  f32 reciprocal in-degree

    # ---- SAGE layer 1 (mean agg). Fin < hidden -> aggregate first, so the N x N
    #      matmul contracts over Fin; 1/deg applied as an f32 VPU row scale.
    neigh1 = invd * jnp.dot(b, x, preferred_element_type=jnp.float32)        # (N, Fin)
    h1 = (jnp.dot(x, ws1_ref[...], preferred_element_type=jnp.float32)
          + jnp.dot(neigh1, wn1_ref[...], preferred_element_type=jnp.float32)
          + b1_ref[...])
    h1 = jnp.maximum(h1, 0.0)                                                # ReLU

    # ---- SAGE layer 2. Fout < hidden -> transform first (reassociated):
    #      diag(1/deg) @ (B @ (H @ W_neigh)) contracts the N x N matmul over Fout.
    hn2 = jnp.dot(h1, wn2_ref[...], preferred_element_type=jnp.float32)      # (N, Fout)
    h2 = (jnp.dot(h1, ws2_ref[...], preferred_element_type=jnp.float32)
          + invd * jnp.dot(b, hn2, preferred_element_type=jnp.float32)
          + b2_ref[...])                                                     # (N, Fout)

    # ---- Dot-product edge predictor, lane-dense (1, TL) output tile.
    # gram[u, v] = h2[u] . h2[v]   (Q @ K^T pattern on the MXU).
    gram = lax.dot_general(h2, h2, (((1,), (1,)), ((), ())),
                           preferred_element_type=jnp.float32)               # (N, N)
    # bf16 0/1 one-hot selector columns for this edge tile -> f32 (exact).
    selu = selu_ref[...].astype(jnp.float32)                                 # (N, TL)
    selv = selv_ref[...].astype(jnp.float32)                                 # (N, TL)
    gv = jnp.dot(gram, selv, preferred_element_type=jnp.float32)             # (N, TL)
    # score[e] = gram[src[e], dst[e]]: select rows via selu, reduce axis 0 on the MXU
    # (ones-row matmul) instead of an XLU cross-sublane sweep.
    ones_row = jnp.ones((1, gram.shape[0]), jnp.float32)
    o_ref[...] = jnp.dot(ones_row, selu * gv, preferred_element_type=jnp.float32)


def sage_with_edge_scores(B, inv_deg, x, params, sel_u, sel_v):
    """Fused forward: returns lane-dense edge scores of shape (1, L)."""
    N, Fin = x.shape
    H = params["w_self1"].shape[1]
    Fout = params["w_self2"].shape[1]
    L = sel_u.shape[1]
    TL = _LANES
    n_tiles = L // TL

    # Advisory cost estimate so XLA can overlap this tiny custom call.
    flops_node = 2 * (N * N * Fin + 2 * N * Fin * H + 2 * N * H * Fout + 2 * N * N * Fout)
    flops_edge = 2 * (N * N * L + N * L)
    bytes_accessed = (B.size * 2 + x.size * 4 + inv_deg.size * 4
                      + sum(int(np.prod(params[k].shape)) * 4 for k in params)
                      + sel_u.size * 2 + sel_v.size * 2 + L * 4)
    cost = pl.CostEstimate(flops=n_tiles * flops_node + flops_edge,
                           transcendentals=0,
                           bytes_accessed=bytes_accessed)

    return pl.pallas_call(
        _fused_sage_predict_kernel,
        out_shape=jax.ShapeDtypeStruct((1, L), jnp.float32),
        grid=(n_tiles,),
        in_specs=[
            pl.BlockSpec((N, N), lambda e: (0, 0)),       # B   (bf16 0/1 adjacency)
            pl.BlockSpec((N, Fin), lambda e: (0, 0)),     # X
            pl.BlockSpec((N, 1), lambda e: (0, 0)),       # 1/deg (f32)
            pl.BlockSpec((Fin, H), lambda e: (0, 0)),     # W_self1
            pl.BlockSpec((Fin, H), lambda e: (0, 0)),     # W_neigh1
            pl.BlockSpec((1, H), lambda e: (0, 0)),       # b1
            pl.BlockSpec((H, Fout), lambda e: (0, 0)),    # W_self2
            pl.BlockSpec((H, Fout), lambda e: (0, 0)),    # W_neigh2
            pl.BlockSpec((1, Fout), lambda e: (0, 0)),    # b2
            pl.BlockSpec((N, TL), lambda e: (0, e)),      # sel_u tile (bf16)
            pl.BlockSpec((N, TL), lambda e: (0, e)),      # sel_v tile (bf16)
        ],
        out_specs=pl.BlockSpec((1, TL), lambda e: (0, e)),
        compiler_params=pltpu.CompilerParams(
            dimension_semantics=("parallel",)),           # edge tiles across TCs (v7x)
        cost_estimate=cost,
    )(B, x, inv_deg, params["w_self1"], params["w_neigh1"], params["b1"],
      params["w_self2"], params["w_neigh2"], params["b2"], sel_u, sel_v)


# ----------------------------------------------------------------------------
# Host-side graph preprocessing + model wrapper
# ----------------------------------------------------------------------------
def build_adjacency(src, dst, num_nodes):
    """0/1 in-neighbor adjacency (bf16, exact) + f32 reciprocal in-degree column."""
    Bm = np.zeros((num_nodes, num_nodes), dtype=np.float32)
    np.add.at(Bm, (np.asarray(dst), np.asarray(src)), 1.0)
    Bm = np.minimum(Bm, 1.0)  # simple graph: multi-edges collapse (matches dense model)
    deg = np.maximum(Bm.sum(axis=1, keepdims=True), 1.0)  # isolated nodes -> zero agg
    inv_deg = (1.0 / deg).astype(np.float32)
    return jnp.asarray(Bm, dtype=jnp.bfloat16), jnp.asarray(inv_deg)


def build_edge_selectors(pos_src, pos_dst, neg_src, neg_dst, num_nodes):
    """One-hot column selectors (N, L) bf16, padded edge axis on the lane axis."""
    pos_pad = _round_up(len(pos_src), _LANES)
    neg_pad = _round_up(len(neg_src), _LANES)

    def cols(idx, width):
        m = np.zeros((num_nodes, width), dtype=np.float32)
        m[np.asarray(idx), np.arange(len(idx))] = 1.0
        return m

    sel_u = np.concatenate([cols(pos_src, pos_pad), cols(neg_src, neg_pad)], axis=1)
    sel_v = np.concatenate([cols(pos_dst, pos_pad), cols(neg_dst, neg_pad)], axis=1)
    return (jnp.asarray(sel_u, dtype=jnp.bfloat16),
            jnp.asarray(sel_v, dtype=jnp.bfloat16), pos_pad, neg_pad)


def init_params(key, in_features, hidden_features, out_features):
    ks = jax.random.split(key, 6)

    def lin(k, fin, fout):
        bound = 1.0 / np.sqrt(fin)
        return jax.random.uniform(k, (fin, fout), jnp.float32, -bound, bound)

    return {
        "w_self1": lin(ks[0], in_features, hidden_features),
        "w_neigh1": lin(ks[1], in_features, hidden_features),
        "b1": jax.random.uniform(ks[2], (1, hidden_features), jnp.float32, -0.1, 0.1),
        "w_self2": lin(ks[3], hidden_features, out_features),
        "w_neigh2": lin(ks[4], hidden_features, out_features),
        "b2": jax.random.uniform(ks[5], (1, out_features), jnp.float32, -0.1, 0.1),
    }


def model_forward(params, B, inv_deg, x, sel_u, sel_v, n_pos, pos_pad, n_neg):
    scores = sage_with_edge_scores(B, inv_deg, x, params, sel_u, sel_v)  # (1, pos_pad+neg_pad)
    pos_score = scores[0, :n_pos].reshape(n_pos, 1)
    neg_score = scores[0, pos_pad:pos_pad + n_neg].reshape(n_neg, 1)
    return pos_score, neg_score


if __name__ == "__main__":
    # --- deterministic synthetic graph (gene interaction graph stand-in) ---
    num_nodes = 16
    in_features, hidden_features, out_features = 8, 32, 16

    base_edges = [(0, 1), (1, 2), (2, 3), (3, 4), (4, 5), (5, 6), (6, 7),
                  (7, 8), (8, 9), (9, 10), (10, 11), (11, 12), (12, 13),
                  (13, 14), (14, 15), (15, 0), (0, 8), (3, 11), (5, 13), (2, 9)]
    # bidirectional, like the original script (both directions appended)
    pos_src_np = np.array([e[0] for e in base_edges] + [e[1] for e in base_edges], dtype=np.int32)
    pos_dst_np = np.array([e[1] for e in base_edges] + [e[0] for e in base_edges], dtype=np.int32)

    # negative graph: deterministic "random" non-edges of the same size
    rng = np.random.RandomState(0)
    neg_src_np = rng.randint(0, num_nodes, size=pos_src_np.shape[0]).astype(np.int32)
    neg_dst_np = rng.randint(0, num_nodes, size=pos_dst_np.shape[0]).astype(np.int32)

    B, inv_deg = build_adjacency(pos_src_np, pos_dst_np, num_nodes)
    sel_u, sel_v, pos_pad, neg_pad = build_edge_selectors(
        pos_src_np, pos_dst_np, neg_src_np, neg_dst_np, num_nodes)

    key = jax.random.PRNGKey(0)
    k_x, k_p = jax.random.split(key)
    x = jax.random.normal(k_x, (num_nodes, in_features), jnp.float32)
    params = init_params(k_p, in_features, hidden_features, out_features)

    n_pos = pos_src_np.shape[0]
    n_neg = neg_src_np.shape[0]
    pos_score, neg_score = model_forward(params, B, inv_deg, x, sel_u, sel_v,
                                         n_pos, pos_pad, n_neg)
    jax.block_until_ready((pos_score, neg_score))

    # --- pure-JAX reference check (straightforward, un-reassociated f32 formulation) ---
    A_ref = jnp.asarray(B, jnp.float32) * inv_deg   # row-normalized adjacency, f32

    def ref_layer(A, H, Ws, Wn, bias, relu):
        out = H @ Ws + (A @ H) @ Wn + bias
        return jnp.maximum(out, 0.0) if relu else out

    h_ref = ref_layer(A_ref, x, params["w_self1"], params["w_neigh1"], params["b1"], True)
    h_ref = ref_layer(A_ref, h_ref, params["w_self2"], params["w_neigh2"], params["b2"], False)
    pos_src = jnp.asarray(pos_src_np); pos_dst = jnp.asarray(pos_dst_np)
    neg_src = jnp.asarray(neg_src_np); neg_dst = jnp.asarray(neg_dst_np)
    pos_ref = jnp.sum(h_ref[pos_src] * h_ref[pos_dst], axis=-1, keepdims=True)
    neg_ref = jnp.sum(h_ref[neg_src] * h_ref[neg_dst], axis=-1, keepdims=True)
    np.testing.assert_allclose(np.asarray(pos_score), np.asarray(pos_ref), rtol=1e-4, atol=2e-4)
    np.testing.assert_allclose(np.asarray(neg_score), np.asarray(neg_ref), rtol=1e-4, atol=2e-4)

    assert pos_score.shape == (n_pos, 1)
    assert neg_score.shape == (n_neg, 1)
    print("KERNEL_OK")
</pallas_src>

<mosaic_0001>
module attributes {stable_mosaic.version = 11 : i64} {
  func.func @_fused_sage_predict_kernel(%arg0: i32, %arg1: memref<16x16xbf16, #tpu.memory_space<vmem>>, %arg2: memref<16x8xf32, #tpu.memory_space<vmem>>, %arg3: memref<16x1xf32, #tpu.memory_space<vmem>>, %arg4: memref<8x32xf32, #tpu.memory_space<vmem>>, %arg5: memref<8x32xf32, #tpu.memory_space<vmem>>, %arg6: memref<1x32xf32, #tpu.memory_space<vmem>>, %arg7: memref<32x16xf32, #tpu.memory_space<vmem>>, %arg8: memref<32x16xf32, #tpu.memory_space<vmem>>, %arg9: memref<1x16xf32, #tpu.memory_space<vmem>>, %arg10: memref<16x128xbf16, #tpu.memory_space<vmem>>, %arg11: memref<16x128xbf16, #tpu.memory_space<vmem>>, %arg12: memref<1x128xf32, #tpu.memory_space<vmem>>) attributes {dimension_semantics = [#tpu.dimension_semantics<parallel>], iteration_bounds = array<i64: 2>, scalar_prefetch = 0 : i64, scratch_operands = 0 : i64, tpu.core_type = #tpu.core_type<tc>, window_params = [{pipeline_mode = #tpu.pipeline_mode<synchronous>, transform_indices = @transform_0, window_bounds = array<i64: 16, 16>}, {pipeline_mode = #tpu.pipeline_mode<synchronous>, transform_indices = @transform_1, window_bounds = array<i64: 16, 8>}, {pipeline_mode = #tpu.pipeline_mode<synchronous>, transform_indices = @transform_2, window_bounds = array<i64: 16, 1>}, {pipeline_mode = #tpu.pipeline_mode<synchronous>, transform_indices = @transform_3, window_bounds = array<i64: 8, 32>}, {pipeline_mode = #tpu.pipeline_mode<synchronous>, transform_indices = @transform_4, window_bounds = array<i64: 8, 32>}, {pipeline_mode = #tpu.pipeline_mode<synchronous>, transform_indices = @transform_5, window_bounds = array<i64: 1, 32>}, {pipeline_mode = #tpu.pipeline_mode<synchronous>, transform_indices = @transform_6, window_bounds = array<i64: 32, 16>}, {pipeline_mode = #tpu.pipeline_mode<synchronous>, transform_indices = @transform_7, window_bounds = array<i64: 32, 16>}, {pipeline_mode = #tpu.pipeline_mode<synchronous>, transform_indices = @transform_8, window_bounds = array<i64: 1, 16>}, {transform_indices = @transform_9, window_bounds = array<i64: 16, 128>}, {transform_indices = @transform_10, window_bounds = array<i64: 16, 128>}, {transform_indices = @transform_11, window_bounds = array<i64: 1, 128>}]} {
    %c0 = arith.constant 0 : index
    %c0_0 = arith.constant 0 : index
    %0 = vector.load %arg1[%c0, %c0_0] : memref<16x16xbf16, #tpu.memory_space<vmem>>, vector<16x16xbf16>
    %1 = arith.extf %0 : vector<16x16xbf16> to vector<16x16xf32>
    %c0_1 = arith.constant 0 : index
    %c0_2 = arith.constant 0 : index
    %2 = vector.load %arg2[%c0_1, %c0_2] : memref<16x8xf32, #tpu.memory_space<vmem>>, vector<16x8xf32>
    %c0_3 = arith.constant 0 : index
    %c0_4 = arith.constant 0 : index
    %3 = vector.load %arg3[%c0_3, %c0_4] : memref<16x1xf32, #tpu.memory_space<vmem>>, vector<16x1xf32>
    %cst = arith.constant dense<0.000000e+00> : vector<16x8xf32>
    %4 = tpu.matmul %1, %2, %cst {dimension_numbers = #tpu.dot_dimension_numbers<[1], [0], [0], [1], [0, 0, 1, 1], [], []>} : vector<16x16xf32>, vector<16x8xf32>, vector<16x8xf32> -> vector<16x8xf32>
    %5 = vector.broadcast %3 : vector<16x1xf32> to vector<16x8xf32>
    %6 = arith.mulf %5, %4 : vector<16x8xf32>
    %c0_5 = arith.constant 0 : index
    %c0_6 = arith.constant 0 : index
    %7 = vector.load %arg4[%c0_5, %c0_6] : memref<8x32xf32, #tpu.memory_space<vmem>>, vector<8x32xf32>
    %cst_7 = arith.constant dense<0.000000e+00> : vector<16x32xf32>
    %8 = tpu.matmul %2, %7, %cst_7 {dimension_numbers = #tpu.dot_dimension_numbers<[1], [0], [0], [1], [0, 0, 1, 1], [], []>} : vector<16x8xf32>, vector<8x32xf32>, vector<16x32xf32> -> vector<16x32xf32>
    %c0_8 = arith.constant 0 : index
    %c0_9 = arith.constant 0 : index
    %9 = vector.load %arg5[%c0_8, %c0_9] : memref<8x32xf32, #tpu.memory_space<vmem>>, vector<8x32xf32>
    %cst_10 = arith.constant dense<0.000000e+00> : vector<16x32xf32>
    %10 = tpu.matmul %6, %9, %cst_10 {dimension_numbers = #tpu.dot_dimension_numbers<[1], [0], [0], [1], [0, 0, 1, 1], [], []>} : vector<16x8xf32>, vector<8x32xf32>, vector<16x32xf32> -> vector<16x32xf32>
    %11 = arith.addf %8, %10 : vector<16x32xf32>
    %c0_11 = arith.constant 0 : index
    %c0_12 = arith.constant 0 : index
    %12 = vector.load %arg6[%c0_11, %c0_12] : memref<1x32xf32, #tpu.memory_space<vmem>>, vector<1x32xf32>
    %13 = vector.broadcast %12 : vector<1x32xf32> to vector<16x32xf32>
    %14 = arith.addf %11, %13 : vector<16x32xf32>
    %cst_13 = arith.constant 0.000000e+00 : f32
    %15 = vector.broadcast %cst_13 : f32 to vector<16x32xf32>
    %16 = arith.maximumf %14, %15 : vector<16x32xf32>
    %c0_14 = arith.constant 0 : index
    %c0_15 = arith.constant 0 : index
    %17 = vector.load %arg8[%c0_14, %c0_15] : memref<32x16xf32, #tpu.memory_space<vmem>>, vector<32x16xf32>
    %cst_16 = arith.constant dense<0.000000e+00> : vector<16x16xf32>
    %18 = tpu.matmul %16, %17, %cst_16 {dimension_numbers = #tpu.dot_dimension_numbers<[1], [0], [0], [1], [0, 0, 1, 1], [], []>} : vector<16x32xf32>, vector<32x16xf32>, vector<16x16xf32> -> vector<16x16xf32>
    %c0_17 = arith.constant 0 : index
    %c0_18 = arith.constant 0 : index
    %19 = vector.load %arg7[%c0_17, %c0_18] : memref<32x16xf32, #tpu.memory_space<vmem>>, vector<32x16xf32>
    %cst_19 = arith.constant dense<0.000000e+00> : vector<16x16xf32>
    %20 = tpu.matmul %16, %19, %cst_19 {dimension_numbers = #tpu.dot_dimension_numbers<[1], [0], [0], [1], [0, 0, 1, 1], [], []>} : vector<16x32xf32>, vector<32x16xf32>, vector<16x16xf32> -> vector<16x16xf32>
    %cst_20 = arith.constant dense<0.000000e+00> : vector<16x16xf32>
    %21 = tpu.matmul %1, %18, %cst_20 {dimension_numbers = #tpu.dot_dimension_numbers<[1], [0], [0], [1], [0, 0, 1, 1], [], []>} : vector<16x16xf32>, vector<16x16xf32>, vector<16x16xf32> -> vector<16x16xf32>
    %22 = vector.broadcast %3 : vector<16x1xf32> to vector<16x16xf32>
    %23 = arith.mulf %22, %21 : vector<16x16xf32>
    %24 = arith.addf %20, %23 : vector<16x16xf32>
    %c0_21 = arith.constant 0 : index
    %c0_22 = arith.constant 0 : index
    %25 = vector.load %arg9[%c0_21, %c0_22] : memref<1x16xf32, #tpu.memory_space<vmem>>, vector<1x16xf32>
    %26 = vector.broadcast %25 : vector<1x16xf32> to vector<16x16xf32>
    %27 = arith.addf %24, %26 : vector<16x16xf32>
    %cst_23 = arith.constant dense<0.000000e+00> : vector<16x16xf32>
    %28 = tpu.matmul %27, %27, %cst_23 {dimension_numbers = #tpu.dot_dimension_numbers<[1], [1], [0], [0], [0, 0, 1, 0], [], []>} : vector<16x16xf32>, vector<16x16xf32>, vector<16x16xf32> -> vector<16x16xf32>
    %c0_24 = arith.constant 0 : index
    %c0_25 = arith.constant 0 : index
    %29 = vector.load %arg10[%c0_24, %c0_25] : memref<16x128xbf16, #tpu.memory_space<vmem>>, vector<16x128xbf16>
    %30 = arith.extf %29 : vector<16x128xbf16> to vector<16x128xf32>
    %c0_26 = arith.constant 0 : index
    %c0_27 = arith.constant 0 : index
    %31 = vector.load %arg11[%c0_26, %c0_27] : memref<16x128xbf16, #tpu.memory_space<vmem>>, vector<16x128xbf16>
    %32 = arith.extf %31 : vector<16x128xbf16> to vector<16x128xf32>
    %cst_28 = arith.constant dense<0.000000e+00> : vector<16x128xf32>
    %33 = tpu.matmul %28, %32, %cst_28 {dimension_numbers = #tpu.dot_dimension_numbers<[1], [0], [0], [1], [0, 0, 1, 1], [], []>} : vector<16x16xf32>, vector<16x128xf32>, vector<16x128xf32> -> vector<16x128xf32>
    %cst_29 = arith.constant 1.000000e+00 : f32
    %34 = vector.broadcast %cst_29 : f32 to vector<1x16xf32>
    %35 = arith.mulf %30, %33 : vector<16x128xf32>
    %cst_30 = arith.constant dense<0.000000e+00> : vector<1x128xf32>
    %36 = tpu.matmul %34, %35, %cst_30 {dimension_numbers = #tpu.dot_dimension_numbers<[1], [0], [0], [1], [0, 0, 1, 1], [], []>} : vector<1x16xf32>, vector<16x128xf32>, vector<1x128xf32> -> vector<1x128xf32>
    %c0_31 = arith.constant 0 : index
    %c0_32 = arith.constant 0 : index
    %37 = vector.load %arg12[%c0_31, %c0_32] : memref<1x128xf32, #tpu.memory_space<vmem>>, vector<1x128xf32>
    tpu.vector_store %arg12[%c0_31, %c0_32], %36 {strides = array<i32>} : memref<1x128xf32, #tpu.memory_space<vmem>>, vector<1x128xf32>,
    return
  }
  func.func @transform_0(%arg0: i32) -> (i32, i32) {
    %c0_i32 = arith.constant 0 : i32
    %c0_i32_0 = arith.constant 0 : i32
    %c0_i32_1 = arith.constant 0 : i32
    return %c0_i32, %c0_i32_0 : i32, i32
  }
  func.func @transform_1(%arg0: i32) -> (i32, i32) {
    %c0_i32 = arith.constant 0 : i32
    %c0_i32_0 = arith.constant 0 : i32
    %c0_i32_1 = arith.constant 0 : i32
    return %c0_i32, %c0_i32_0 : i32, i32
  }
  func.func @transform_2(%arg0: i32) -> (i32, i32) {
    %c0_i32 = arith.constant 0 : i32
    %c0_i32_0 = arith.constant 0 : i32
    %c0_i32_1 = arith.constant 0 : i32
    return %c0_i32, %c0_i32_0 : i32, i32
  }
  func.func @transform_3(%arg0: i32) -> (i32, i32) {
    %c0_i32 = arith.constant 0 : i32
    %c0_i32_0 = arith.constant 0 : i32
    %c0_i32_1 = arith.constant 0 : i32
    return %c0_i32, %c0_i32_0 : i32, i32
  }
  func.func @transform_4(%arg0: i32) -> (i32, i32) {
    %c0_i32 = arith.constant 0 : i32
    %c0_i32_0 = arith.constant 0 : i32
    %c0_i32_1 = arith.constant 0 : i32
    return %c0_i32, %c0_i32_0 : i32, i32
  }
  func.func @transform_5(%arg0: i32) -> (i32, i32) {
    %c0_i32 = arith.constant 0 : i32
    %c0_i32_0 = arith.constant 0 : i32
    %c0_i32_1 = arith.constant 0 : i32
    return %c0_i32, %c0_i32_0 : i32, i32
  }
  func.func @transform_6(%arg0: i32) -> (i32, i32) {
    %c0_i32 = arith.constant 0 : i32
    %c0_i32_0 = arith.constant 0 : i32
    %c0_i32_1 = arith.constant 0 : i32
    return %c0_i32, %c0_i32_0 : i32, i32
  }
  func.func @transform_7(%arg0: i32) -> (i32, i32) {
    %c0_i32 = arith.constant 0 : i32
    %c0_i32_0 = arith.constant 0 : i32
    %c0_i32_1 = arith.constant 0 : i32
    return %c0_i32, %c0_i32_0 : i32, i32
  }
  func.func @transform_8(%arg0: i32) -> (i32, i32) {
    %c0_i32 = arith.constant 0 : i32
    %c0_i32_0 = arith.constant 0 : i32
    %c0_i32_1 = arith.constant 0 : i32
    return %c0_i32, %c0_i32_0 : i32, i32
  }
  func.func @transform_9(%arg0: i32) -> (i32, i32) {
    %c0_i32 = arith.constant 0 : i32
    %c0_i32_0 = arith.constant 0 : i32
    return %c0_i32, %arg0 : i32, i32
  }
  func.func @transform_10(%arg0: i32) -> (i32, i32) {
    %c0_i32 = arith.constant 0 : i32
    %c0_i32_0 = arith.constant 0 : i32
    return %c0_i32, %arg0 : i32, i32
  }
  func.func @transform_11(%arg0: i32) -> (i32, i32) {
    %c0_i32 = arith.constant 0 : i32
    %c0_i32_0 = arith.constant 0 : i32
    return %c0_i32, %arg0 : i32, i32
  }
}

</mosaic_0001>

<llo_original>
// kernel: tpu_custom_call.1
$region0: #{tpu_custom_call.1}
  #allocation0 [shape = 'u32[]', space=smem, size = 0x4, offset = 0x4, fixed_abs, tag = 'smem constant byte address 0x4 - core index']
  #allocation1 [shape = 'u32[144,128]{1,0:T(1,128)}', space=vmem, size = 0x12000, scoped, tag = 'internal scratch']
  %s0 = inlined_call_operand.vmem [shape: bf16[16,16], index: 0, kind: input, shape index: {}]
  %s1 = inlined_call_operand.vmem [shape: f32[16,8], index: 1, kind: input, shape index: {}]
  %s2 = inlined_call_operand.vmem [shape: f32[16,1], index: 2, kind: input, shape index: {}]
  %s3 = inlined_call_operand.vmem [shape: f32[8,32], index: 3, kind: input, shape index: {}]
  %s4 = inlined_call_operand.vmem [shape: f32[8,32], index: 4, kind: input, shape index: {}]
  %s5 = inlined_call_operand.vmem [shape: f32[1,32], index: 5, kind: input, shape index: {}]
  %s6 = inlined_call_operand.vmem [shape: f32[32,16], index: 6, kind: input, shape index: {}]
  %s7 = inlined_call_operand.vmem [shape: f32[32,16], index: 7, kind: input, shape index: {}]
  %s8 = inlined_call_operand.vmem [shape: f32[1,16], index: 8, kind: input, shape index: {}]
  %s9 = inlined_call_operand.vmem [shape: bf16[16,256], index: 9, kind: input, shape index: {}]
  %s10 = inlined_call_operand.vmem [shape: bf16[16,256], index: 10, kind: input, shape index: {}]
  %s11 = inlined_call_operand.hbm [shape: f32[1,256], index: 11, kind: output, shape index: {}]
  %s12 = sld [smem:[#allocation0]]
  $region159: #{tpu_custom_call.1} parent=0
    _
  %s14 = ssub.s32 1, %s12
  %s15 = scalar_select 0, %s14, %s12
  $region1: #{tpu_custom_call.1} parent=0
    #allocation2 [shape = 'u8[8192]{0}', space=vmem, size = 0x2000, scoped, tag = 'input window, operand 9']
    #allocation3 [shape = 'u8[8192]{0}', space=vmem, size = 0x2000, scoped, tag = 'input window, operand 10']
    #allocation4 [shape = 'u8[1024]{0}', space=vmem, size = 0x400, scoped, tag = 'output window, operand 0']
    #allocation5 [shape = 's32[2]{0}', space=sflag, size = 0x8, scoped, tag = 'scoped memory for tpu_custom_call.1']
    %16 = vsyncpa [#allocation5], 0
    %s17 = scalar_lea.sflag [#allocation5], 1
    %18 = vsyncpa %s17, 0
    loop: start=0, step=1, limit=4
    $region2: #{tpu_custom_call.1} parent=1 // loop_pre_header
      _
    $region3: #{tpu_custom_call.1} parent=1 // loop_header
      %s20 = sphi 0, %s24
      %p21 = scmp.ge.s32.totalorder %s20, 4
      %s28 = sphi 0, %s28
      %s30 = sphi 0, %s28
      %s31 = sphi 0, %s30
      %s45 = sphi 0, %s31
      %s49 = sphi 0, %s49
      %s51 = sphi 0, %s49
      %s52 = sphi 0, %s51
      %s66 = sphi 0, %s52
      %s70 = sphi 0, %s70
      %s72 = sphi 0, %s70
      %s73 = sphi 0, %s72
      %s87 = sphi 0, %s73
      %s91 = sphi 0, %s91
      %s93 = sphi 0, %s91
      %s94 = sphi 0, %s93
      %s108 = sphi 0, %s94
      %s112 = sphi 0, %s112
      %s114 = sphi 0, %s112
      %s115 = sphi 0, %s114
      %s129 = sphi 0, %s115
      %s133 = sphi 0, %s133
      %s135 = sphi 0, %s133
      %s136 = sphi 0, %s135
      %s150 = sphi 0, %s136
      %s154 = sphi 0, %s154
      %s156 = sphi 0, %s154
      %s157 = sphi 0, %s156
      %s171 = sphi 0, %s157
      %s175 = sphi 0, %s175
      %s177 = sphi 0, %s175
      %s178 = sphi 0, %s177
      %s192 = sphi 0, %s178
      %s196 = sphi 0, %s196
      %s198 = sphi 0, %s196
      %s199 = sphi 0, %s198
      %s213 = sphi 0, %s199
      %s219 = sphi 0, %s221
      %s222 = sphi 0, %s219
      %s223 = sphi 0, %s222
      %s239 = sphi 0, %s223
      %s245 = sphi 0, %s247
      %s248 = sphi 0, %s245
      %s249 = sphi 0, %s248
      %s265 = sphi 0, %s249
      %s271 = sphi 0, %s273
      %s274 = sphi 0, %s271
      %s275 = sphi 0, %s274
      %s291 = sphi 0, %s275
    $region4: #{tpu_custom_call.1} parent=1 // loop_header_branch
      %23 = sbr.rel (%p21) target = $region8
    $region5: #{tpu_custom_call.1} parent=1 // loop_body
      %s25 = ssub.s32 %s20, 1
      %s26 = ssub.s32 %s20, 2
      %s27 = sadd.s32 %s20, 1
      %s29 = sadd.s32 %s28, 1
      %p32 = scmp.eq.s32.totalorder %s20, 1
      %p33 = scmp.ne.s32.totalorder %s28, %s30
      %p34 = scmp.eq.s32.totalorder %s20, 0
      %p35 = por %p33, %p34
      %p36 = scmp.ne.s32.totalorder %s28, %s30
      %p37 = scmp.eq.s32.totalorder %s25, 1
      %p38 = por %p36, %p37
      %p39 = scmp.ne.s32.totalorder %s30, %s31
      %p40 = scmp.eq.s32.totalorder %s25, 0
      %p41 = por %p39, %p40
      %p42 = scmp.ne.s32.totalorder %s30, %s31
      %p43 = scmp.eq.s32.totalorder %s26, 1
      %p44 = por %p42, %p43
      %p46 = scmp.ne.s32.totalorder %s31, %s45
      %p47 = scmp.eq.s32.totalorder %s26, 0
      %p48 = por %p46, %p47
      %s50 = sadd.s32 %s49, 1
      %p53 = scmp.eq.s32.totalorder %s20, 1
      %p54 = scmp.ne.s32.totalorder %s49, %s51
      %p55 = scmp.eq.s32.totalorder %s20, 0
      %p56 = por %p54, %p55
      %p57 = scmp.ne.s32.totalorder %s49, %s51
      %p58 = scmp.eq.s32.totalorder %s25, 1
      %p59 = por %p57, %p58
      %p60 = scmp.ne.s32.totalorder %s51, %s52
      %p61 = scmp.eq.s32.totalorder %s25, 0
      %p62 = por %p60, %p61
      %p63 = scmp.ne.s32.totalorder %s51, %s52
      %p64 = scmp.eq.s32.totalorder %s26, 1
      %p65 = por %p63, %p64
      %p67 = scmp.ne.s32.totalorder %s52, %s66
      %p68 = scmp.eq.s32.totalorder %s26, 0
      %p69 = por %p67, %p68
      %s71 = sadd.s32 %s70, 1
      %p74 = scmp.eq.s32.totalorder %s20, 1
      %p75 = scmp.ne.s32.totalorder %s70, %s72
      %p76 = scmp.eq.s32.totalorder %s20, 0
      %p77 = por %p75, %p76
      %p78 = scmp.ne.s32.totalorder %s70, %s72
      %p79 = scmp.eq.s32.totalorder %s25, 1
      %p80 = por %p78, %p79
      %p81 = scmp.ne.s32.totalorder %s72, %s73
      %p82 = scmp.eq.s32.totalorder %s25, 0
      %p83 = por %p81, %p82
      %p84 = scmp.ne.s32.totalorder %s72, %s73
      %p85 = scmp.eq.s32.totalorder %s26, 1
      %p86 = por %p84, %p85
      %p88 = scmp.ne.s32.totalorder %s73, %s87
      %p89 = scmp.eq.s32.totalorder %s26, 0
      %p90 = por %p88, %p89
      %s92 = sadd.s32 %s91, 1
      %p95 = scmp.eq.s32.totalorder %s20, 1
      %p96 = scmp.ne.s32.totalorder %s91, %s93
      %p97 = scmp.eq.s32.totalorder %s20, 0
      %p98 = por %p96, %p97
      %p99 = scmp.ne.s32.totalorder %s91, %s93
      %p100 = scmp.eq.s32.totalorder %s25, 1
      %p101 = por %p99, %p100
      %p102 = scmp.ne.s32.totalorder %s93, %s94
      %p103 = scmp.eq.s32.totalorder %s25, 0
      %p104 = por %p102, %p103
      %p105 = scmp.ne.s32.totalorder %s93, %s94
      %p106 = scmp.eq.s32.totalorder %s26, 1
      %p107 = por %p105, %p106
      %p109 = scmp.ne.s32.totalorder %s94, %s108
      %p110 = scmp.eq.s32.totalorder %s26, 0
      %p111 = por %p109, %p110
      %s113 = sadd.s32 %s112, 1
      %p116 = scmp.eq.s32.totalorder %s20, 1
      %p117 = scmp.ne.s32.totalorder %s112, %s114
      %p118 = scmp.eq.s32.totalorder %s20, 0
      %p119 = por %p117, %p118
      %p120 = scmp.ne.s32.totalorder %s112, %s114
      %p121 = scmp.eq.s32.totalorder %s25, 1
      %p122 = por %p120, %p121
      %p123 = scmp.ne.s32.totalorder %s114, %s115
      %p124 = scmp.eq.s32.totalorder %s25, 0
      %p125 = por %p123, %p124
      %p126 = scmp.ne.s32.totalorder %s114, %s115
      %p127 = scmp.eq.s32.totalorder %s26, 1
      %p128 = por %p126, %p127
      %p130 = scmp.ne.s32.totalorder %s115, %s129
      %p131 = scmp.eq.s32.totalorder %s26, 0
      %p132 = por %p130, %p131
      %s134 = sadd.s32 %s133, 1
      %p137 = scmp.eq.s32.totalorder %s20, 1
      %p138 = scmp.ne.s32.totalorder %s133, %s135
      %p139 = scmp.eq.s32.totalorder %s20, 0
      %p140 = por %p138, %p139
      %p141 = scmp.ne.s32.totalorder %s133, %s135
      %p142 = scmp.eq.s32.totalorder %s25, 1
      %p143 = por %p141, %p142
      %p144 = scmp.ne.s32.totalorder %s135, %s136
      %p145 = scmp.eq.s32.totalorder %s25, 0
      %p146 = por %p144, %p145
      %p147 = scmp.ne.s32.totalorder %s135, %s136
      %p148 = scmp.eq.s32.totalorder %s26, 1
      %p149 = por %p147, %p148
      %p151 = scmp.ne.s32.totalorder %s136, %s150
      %p152 = scmp.eq.s32.totalorder %s26, 0
      %p153 = por %p151, %p152
      %s155 = sadd.s32 %s154, 1
      %p158 = scmp.eq.s32.totalorder %s20, 1
      %p159 = scmp.ne.s32.totalorder %s154, %s156
      %p160 = scmp.eq.s32.totalorder %s20, 0
      %p161 = por %p159, %p160
      %p162 = scmp.ne.s32.totalorder %s154, %s156
      %p163 = scmp.eq.s32.totalorder %s25, 1
      %p164 = por %p162, %p163
      %p165 = scmp.ne.s32.totalorder %s156, %s157
      %p166 = scmp.eq.s32.totalorder %s25, 0
      %p167 = por %p165, %p166
      %p168 = scmp.ne.s32.totalorder %s156, %s157
      %p169 = scmp.eq.s32.totalorder %s26, 1
      %p170 = por %p168, %p169
      %p172 = scmp.ne.s32.totalorder %s157, %s171
      %p173 = scmp.eq.s32.totalorder %s26, 0
      %p174 = por %p172, %p173
      %s176 = sadd.s32 %s175, 1
      %p179 = scmp.eq.s32.totalorder %s20, 1
      %p180 = scmp.ne.s32.totalorder %s175, %s177
      %p181 = scmp.eq.s32.totalorder %s20, 0
      %p182 = por %p180, %p181
      %p183 = scmp.ne.s32.totalorder %s175, %s177
      %p184 = scmp.eq.s32.totalorder %s25, 1
      %p185 = por %p183, %p184
      %p186 = scmp.ne.s32.totalorder %s177, %s178
      %p187 = scmp.eq.s32.totalorder %s25, 0
      %p188 = por %p186, %p187
      %p189 = scmp.ne.s32.totalorder %s177, %s178
      %p190 = scmp.eq.s32.totalorder %s26, 1
      %p191 = por %p189, %p190
      %p193 = scmp.ne.s32.totalorder %s178, %s192
      %p194 = scmp.eq.s32.totalorder %s26, 0
      %p195 = por %p193, %p194
      %s197 = sadd.s32 %s196, 1
      %p200 = scmp.eq.s32.totalorder %s20, 1
      %p201 = scmp.ne.s32.totalorder %s196, %s198
      %p202 = scmp.eq.s32.totalorder %s20, 0
      %p203 = por %p201, %p202
      %p204 = scmp.ne.s32.totalorder %s196, %s198
      %p205 = scmp.eq.s32.totalorder %s25, 1
      %p206 = por %p204, %p205
      %p207 = scmp.ne.s32.totalorder %s198, %s199
      %p208 = scmp.eq.s32.totalorder %s25, 0
      %p209 = por %p207, %p208
      %p210 = scmp.ne.s32.totalorder %s198, %s199
      %p211 = scmp.eq.s32.totalorder %s26, 1
      %p212 = por %p210, %p211
      %p214 = scmp.ne.s32.totalorder %s199, %s213
      %p215 = scmp.eq.s32.totalorder %s26, 0
      %p216 = por %p214, %p215
      %s217 = ssub.s32 %s20, %s27
      %p218 = scmp.eq.s32.totalorder %s217, 0
      %s220 = sadd.s32 %s219, 1
      %s221 = scalar_select %p218, %s219, %s220
      %p224 = pneg %p218
      %p225 = scmp.eq.s32.totalorder %s20, 1
      %p226 = por %p224, %p225
      %p227 = scmp.ne.s32.totalorder %s219, %s222
      %p228 = scmp.eq.s32.totalorder %s20, 0
      %p229 = por %p227, %p228
      %p230 = scmp.ne.s32.totalorder %s219, %s222
      %p231 = scmp.eq.s32.totalorder %s25, 1
      %p232 = por %p230, %p231
      %p233 = scmp.ne.s32.totalorder %s222, %s223
      %p234 = scmp.eq.s32.totalorder %s25, 0
      %p235 = por %p233, %p234
      %p236 = scmp.ne.s32.totalorder %s222, %s223
      %p237 = scmp.eq.s32.totalorder %s26, 1
      %p238 = por %p236, %p237
      %p240 = scmp.ne.s32.totalorder %s223, %s239
      %p241 = scmp.eq.s32.totalorder %s26, 0
      %p242 = por %p240, %p241
      %s243 = ssub.s32 %s20, %s27
      %p244 = scmp.eq.s32.totalorder %s243, 0
      %s246 = sadd.s32 %s245, 1
      %s247 = scalar_select %p244, %s245, %s246
      %p250 = pneg %p244
      %p251 = scmp.eq.s32.totalorder %s20, 1
      %p252 = por %p250, %p251
      %p253 = scmp.ne.s32.totalorder %s245, %s248
      %p254 = scmp.eq.s32.totalorder %s20, 0
      %p255 = por %p253, %p254
      %p256 = scmp.ne.s32.totalorder %s245, %s248
      %p257 = scmp.eq.s32.totalorder %s25, 1
      %p258 = por %p256, %p257
      %p259 = scmp.ne.s32.totalorder %s248, %s249
      %p260 = scmp.eq.s32.totalorder %s25, 0
      %p261 = por %p259, %p260
      %p262 = scmp.ne.s32.totalorder %s248, %s249
      %p263 = scmp.eq.s32.totalorder %s26, 1
      %p264 = por %p262, %p263
      %p266 = scmp.ne.s32.totalorder %s249, %s265
      %p267 = scmp.eq.s32.totalorder %s26, 0
      %p268 = por %p266, %p267
      %s269 = ssub.s32 %s20, %s27
      %p270 = scmp.eq.s32.totalorder %s269, 0
      %s272 = sadd.s32 %s271, 1
      %s273 = scalar_select %p270, %s271, %s272
      %p276 = pneg %p270
      %p277 = scmp.eq.s32.totalorder %s20, 1
      %p278 = por %p276, %p277
      %p279 = scmp.ne.s32.totalorder %s271, %s274
      %p280 = scmp.eq.s32.totalorder %s20, 0
      %p281 = por %p279, %p280
      %p282 = scmp.ne.s32.totalorder %s271, %s274
      %p283 = scmp.eq.s32.totalorder %s25, 1
      %p284 = por %p282, %p283
      %p285 = scmp.ne.s32.totalorder %s274, %s275
      %p286 = scmp.eq.s32.totalorder %s25, 0
      %p287 = por %p285, %p286
      %p288 = scmp.ne.s32.totalorder %s274, %s275
      %p289 = scmp.eq.s32.totalorder %s26, 1
      %p290 = por %p288, %p289
      %p292 = scmp.ne.s32.totalorder %s275, %s291
      %p293 = scmp.eq.s32.totalorder %s26, 0
      %p294 = por %p292, %p293
      %p295 = scmp.le.s32.totalorder 1, %s20
      %p296 = scmp.lt.s32.totalorder %s20, 3
      %p297 = pnand %p295, %p296
      %p298 = pneg %p297
      // Predicated region
      $region9: #{tpu_custom_call.1} parent=5 // pred_check
        _
      $region10: #{tpu_custom_call.1} parent=5 // pred_check_branch
        %300 = sbr.rel (%p297) target = $region12
      $region11: #{tpu_custom_call.1} parent=5 // pred_region
        %s301 = ssub.s32 %s20, 1
        // Predicated region
        $region13: #{tpu_custom_call.1} parent=11 // pred_check
          %p302 = pneg %p41
        $region14: #{tpu_custom_call.1} parent=11 // pred_check_branch
          %304 = sbr.rel (%p302) target = $region16
        $region15: #{tpu_custom_call.1} parent=11 // pred_region
          _
        $region16: #{tpu_custom_call.1} parent=11 // pred_fallthru
          _
        // Predicated region
        $region17: #{tpu_custom_call.1} parent=11 // pred_check
          %p305 = pneg %p62
        $region18: #{tpu_custom_call.1} parent=11 // pred_check_branch
          %307 = sbr.rel (%p305) target = $region20
        $region19: #{tpu_custom_call.1} parent=11 // pred_region
          _
        $region20: #{tpu_custom_call.1} parent=11 // pred_fallthru
          _
        // Predicated region
        $region21: #{tpu_custom_call.1} parent=11 // pred_check
          %p308 = pneg %p83
        $region22: #{tpu_custom_call.1} parent=11 // pred_check_branch
          %310 = sbr.rel (%p308) target = $region24
        $region23: #{tpu_custom_call.1} parent=11 // pred_region
          _
        $region24: #{tpu_custom_call.1} parent=11 // pred_fallthru
          _
        // Predicated region
        $region25: #{tpu_custom_call.1} parent=11 // pred_check
          %p311 = pneg %p104
        $region26: #{tpu_custom_call.1} parent=11 // pred_check_branch
          %313 = sbr.rel (%p311) target = $region28
        $region27: #{tpu_custom_call.1} parent=11 // pred_region
          _
        $region28: #{tpu_custom_call.1} parent=11 // pred_fallthru
          _
        // Predicated region
        $region29: #{tpu_custom_call.1} parent=11 // pred_check
          %p314 = pneg %p125
        $region30: #{tpu_custom_call.1} parent=11 // pred_check_branch
          %316 = sbr.rel (%p314) target = $region32
        $region31: #{tpu_custom_call.1} parent=11 // pred_region
          _
        $region32: #{tpu_custom_call.1} parent=11 // pred_fallthru
          _
        // Predicated region
        $region33: #{tpu_custom_call.1} parent=11 // pred_check
          %p317 = pneg %p146
        $region34: #{tpu_custom_call.1} parent=11 // pred_check_branch
          %319 = sbr.rel (%p317) target = $region36
        $region35: #{tpu_custom_call.1} parent=11 // pred_region
          _
        $region36: #{tpu_custom_call.1} parent=11 // pred_fallthru
          _
        // Predicated region
        $region37: #{tpu_custom_call.1} parent=11 // pred_check
          %p320 = pneg %p167
        $region38: #{tpu_custom_call.1} parent=11 // pred_check_branch
          %322 = sbr.rel (%p320) target = $region40
        $region39: #{tpu_custom_call.1} parent=11 // pred_region
          _
        $region40: #{tpu_custom_call.1} parent=11 // pred_fallthru
          _
        // Predicated region
        $region41: #{tpu_custom_call.1} parent=11 // pred_check
          %p323 = pneg %p188
        $region42: #{tpu_custom_call.1} parent=11 // pred_check_branch
          %325 = sbr.rel (%p323) target = $region44
        $region43: #{tpu_custom_call.1} parent=11 // pred_region
          _
        $region44: #{tpu_custom_call.1} parent=11 // pred_fallthru
          _
        // Predicated region
        $region45: #{tpu_custom_call.1} parent=11 // pred_check
          %p326 = pneg %p209
        $region46: #{tpu_custom_call.1} parent=11 // pred_check_branch
          %328 = sbr.rel (%p326) target = $region48
        $region47: #{tpu_custom_call.1} parent=11 // pred_region
          _
        $region48: #{tpu_custom_call.1} parent=11 // pred_fallthru
          _
      $region12: #{tpu_custom_call.1} parent=5 // pred_fallthru
        _
      %p329 = scmp.lt.s32.totalorder %s20, 2
      // Predicated region
      $region49: #{tpu_custom_call.1} parent=5 // pred_check
        %p330 = pneg %p329
      $region50: #{tpu_custom_call.1} parent=5 // pred_check_branch
        %332 = sbr.rel (%p330) target = $region52
      $region51: #{tpu_custom_call.1} parent=5 // pred_region
        // Predicated region
        $region53: #{tpu_custom_call.1} parent=51 // pred_check
          %p333 = pneg %p229
        $region54: #{tpu_custom_call.1} parent=51 // pred_check_branch
          %335 = sbr.rel (%p333) target = $region56
        $region55: #{tpu_custom_call.1} parent=51 // pred_region
          %s336 = sand.u32 %s219, 1
          %s337 = sand.u32 %s219, 1
          %s338 = smul.addr %s337, 8
          %s339 = scalar_lea.vmem [#allocation2], %s338
          %s340 = smul.addr %s20, 4
          %s341 = scalar_lea.vmem %s9, %s340
          // Predicated region
          $region57: #{tpu_custom_call.1} parent=55 // pred_check
            _
          $region58: #{tpu_custom_call.1} parent=55 // pred_check_branch
            %343 = sbr.rel (0) target = $region60
          $region59: #{tpu_custom_call.1} parent=55 // pred_region
            // Predicated region
            $region61: #{tpu_custom_call.1} parent=59 // pred_check
              _
            $region62: #{tpu_custom_call.1} parent=59 // pred_check_branch
              %345 = sbr.rel target = $region64
            $region63: #{tpu_custom_call.1} parent=59 // pred_region
              // Predicated region
              $region76: #{tpu_custom_call.1} parent=63 // pred_check
                _
              $region77: #{tpu_custom_call.1} parent=63 // pred_check_branch
                %363 = sbr.rel (0) target = $region79
              $region78: #{tpu_custom_call.1} parent=63 // pred_region
                loop: start=0, step=1, limit=1
                $region80: #{tpu_custom_call.1} parent=78 // loop_pre_header
                  _
                $region81: #{tpu_custom_call.1} parent=78 // loop_header
                  %s365 = sphi 0, %s369
                  %p366 = scmp.ge.s32.totalorder %s365, 1
                  %s370 = sphi %s341, %s341
                  %s371 = sphi %s339, %s339
                $region82: #{tpu_custom_call.1} parent=78 // loop_header_branch
                  %368 = sbr.rel (%p366) target = $region86
                $region83: #{tpu_custom_call.1} parent=78 // loop_body
                  _
                $region84: #{tpu_custom_call.1} parent=78 // loop_footer
                  %s369 = sadd.s32 1, %s365
                $region85: #{tpu_custom_call.1} parent=78 // loop_footer_branch
                  %364 = sbr.rel target = $region81
                $region86: #{tpu_custom_call.1} parent=78 // loop_exit
                  _
                %s373 = ssub.s32 16, 1
                loop: start=0, step=1, limit=1
                $region87: #{tpu_custom_call.1} parent=78 // loop_pre_header
                  _
                $region88: #{tpu_custom_call.1} parent=78 // loop_header
                  %s375 = sphi 0, %s379
                  %p376 = scmp.ge.s32.totalorder %s375, 1
                  %s380 = sphi %s341, %s341
                  %s381 = sphi %s339, %s339
                $region89: #{tpu_custom_call.1} parent=78 // loop_header_branch
                  %378 = sbr.rel (%p376) target = $region93
                $region90: #{tpu_custom_call.1} parent=78 // loop_body
                  %v382 = vld [vmem:[%s380] sm:%s373]
                  %383 = vst [vmem:[%s381] sm:%s373] %v382
                  %v384 = vld [vmem:[%s380 + $0x8] sm:%s373]
                  %385 = vst [vmem:[%s381 + $0x4] sm:%s373] %v384
                $region91: #{tpu_custom_call.1} parent=78 // loop_footer
                  %s379 = sadd.s32 1, %s375
                $region92: #{tpu_custom_call.1} parent=78 // loop_footer_branch
                  %374 = sbr.rel target = $region88
                $region93: #{tpu_custom_call.1} parent=78 // loop_exit
                  _
              $region79: #{tpu_custom_call.1} parent=63 // pred_fallthru
                _
            $region64: #{tpu_custom_call.1} parent=59 // pred_fallthru
              _
            // Predicated region
            $region65: #{tpu_custom_call.1} parent=59 // pred_check
              _
            $region66: #{tpu_custom_call.1} parent=59 // pred_check_branch
              %347 = sbr.rel (0) target = $region68
            $region67: #{tpu_custom_call.1} parent=59 // pred_region
              %s349 = ssub.s32 16, 1
              loop: start=0, step=1, limit=1
              $region69: #{tpu_custom_call.1} parent=67 // loop_pre_header
                _
              $region70: #{tpu_custom_call.1} parent=67 // loop_header
                %s351 = sphi 0, %s355
                %p352 = scmp.ge.s32.totalorder %s351, 1
                %s356 = sphi %s341, %s341
                %s357 = sphi %s339, %s339
              $region71: #{tpu_custom_call.1} parent=67 // loop_header_branch
                %354 = sbr.rel (%p352) target = $region75
              $region72: #{tpu_custom_call.1} parent=67 // loop_body
                %v358 = vld [vmem:[%s356] sm:%s349]
                %359 = vst [vmem:[%s357] sm:%s349] %v358
                %v360 = vld [vmem:[%s356 + $0x8] sm:%s349]
                %361 = vst [vmem:[%s357 + $0x4] sm:%s349] %v360
              $region73: #{tpu_custom_call.1} parent=67 // loop_footer
                %s355 = sadd.s32 1, %s351
              $region74: #{tpu_custom_call.1} parent=67 // loop_footer_branch
                %350 = sbr.rel target = $region70
              $region75: #{tpu_custom_call.1} parent=67 // loop_exit
                _
            $region68: #{tpu_custom_call.1} parent=59 // pred_fallthru
              _
          $region60: #{tpu_custom_call.1} parent=55 // pred_fallthru
            _
          %386 = vnop
        $region56: #{tpu_custom_call.1} parent=51 // pred_fallthru
          _
        // Predicated region
        $region94: #{tpu_custom_call.1} parent=51 // pred_check
          %p387 = pneg %p255
        $region95: #{tpu_custom_call.1} parent=51 // pred_check_branch
          %389 = sbr.rel (%p387) target = $region97
        $region96: #{tpu_custom_call.1} parent=51 // pred_region
          %s390 = sand.u32 %s245, 1
          %s391 = sand.u32 %s245, 1
          %s392 = smul.addr %s391, 8
          %s393 = scalar_lea.vmem [#allocation3], %s392
          %s394 = smul.addr %s20, 4
          %s395 = scalar_lea.vmem %s10, %s394
          // Predicated region
          $region98: #{tpu_custom_call.1} parent=96 // pred_check
            _
          $region99: #{tpu_custom_call.1} parent=96 // pred_check_branch
            %397 = sbr.rel (0) target = $region101
          $region100: #{tpu_custom_call.1} parent=96 // pred_region
            // Predicated region
            $region102: #{tpu_custom_call.1} parent=100 // pred_check
              _
            $region103: #{tpu_custom_call.1} parent=100 // pred_check_branch
              %399 = sbr.rel target = $region105
            $region104: #{tpu_custom_call.1} parent=100 // pred_region
              // Predicated region
              $region117: #{tpu_custom_call.1} parent=104 // pred_check
                _
              $region118: #{tpu_custom_call.1} parent=104 // pred_check_branch
                %417 = sbr.rel (0) target = $region120
              $region119: #{tpu_custom_call.1} parent=104 // pred_region
                loop: start=0, step=1, limit=1
                $region121: #{tpu_custom_call.1} parent=119 // loop_pre_header
                  _
                $region122: #{tpu_custom_call.1} parent=119 // loop_header
                  %s419 = sphi 0, %s423
                  %p420 = scmp.ge.s32.totalorder %s419, 1
                  %s424 = sphi %s395, %s395
                  %s425 = sphi %s393, %s393
                $region123: #{tpu_custom_call.1} parent=119 // loop_header_branch
                  %422 = sbr.rel (%p420) target = $region127
                $region124: #{tpu_custom_call.1} parent=119 // loop_body
                  _
                $region125: #{tpu_custom_call.1} parent=119 // loop_footer
                  %s423 = sadd.s32 1, %s419
                $region126: #{tpu_custom_call.1} parent=119 // loop_footer_branch
                  %418 = sbr.rel target = $region122
                $region127: #{tpu_custom_call.1} parent=119 // loop_exit
                  _
                %s427 = ssub.s32 16, 1
                loop: start=0, step=1, limit=1
                $region128: #{tpu_custom_call.1} parent=119 // loop_pre_header
                  _
                $region129: #{tpu_custom_call.1} parent=119 // loop_header
                  %s429 = sphi 0, %s433
                  %p430 = scmp.ge.s32.totalorder %s429, 1
                  %s434 = sphi %s395, %s395
                  %s435 = sphi %s393, %s393
                $region130: #{tpu_custom_call.1} parent=119 // loop_header_branch
                  %432 = sbr.rel (%p430) target = $region134
                $region131: #{tpu_custom_call.1} parent=119 // loop_body
                  %v436 = vld [vmem:[%s434] sm:%s427]
                  %437 = vst [vmem:[%s435] sm:%s427] %v436
                  %v438 = vld [vmem:[%s434 + $0x8] sm:%s427]
                  %439 = vst [vmem:[%s435 + $0x4] sm:%s427] %v438
                $region132: #{tpu_custom_call.1} parent=119 // loop_footer
                  %s433 = sadd.s32 1, %s429
                $region133: #{tpu_custom_call.1} parent=119 // loop_footer_branch
                  %428 = sbr.rel target = $region129
                $region134: #{tpu_custom_call.1} parent=119 // loop_exit
                  _
              $region120: #{tpu_custom_call.1} parent=104 // pred_fallthru
                _
            $region105: #{tpu_custom_call.1} parent=100 // pred_fallthru
              _
            // Predicated region
            $region106: #{tpu_custom_call.1} parent=100 // pred_check
              _
            $region107: #{tpu_custom_call.1} parent=100 // pred_check_branch
              %401 = sbr.rel (0) target = $region109
            $region108: #{tpu_custom_call.1} parent=100 // pred_region
              %s403 = ssub.s32 16, 1
              loop: start=0, step=1, limit=1
              $region110: #{tpu_custom_call.1} parent=108 // loop_pre_header
                _
              $region111: #{tpu_custom_call.1} parent=108 // loop_header
                %s405 = sphi 0, %s409
                %p406 = scmp.ge.s32.totalorder %s405, 1
                %s410 = sphi %s395, %s395
                %s411 = sphi %s393, %s393
              $region112: #{tpu_custom_call.1} parent=108 // loop_header_branch
                %408 = sbr.rel (%p406) target = $region116
              $region113: #{tpu_custom_call.1} parent=108 // loop_body
                %v412 = vld [vmem:[%s410] sm:%s403]
                %413 = vst [vmem:[%s411] sm:%s403] %v412
                %v414 = vld [vmem:[%s410 + $0x8] sm:%s403]
                %415 = vst [vmem:[%s411 + $0x4] sm:%s403] %v414
              $region114: #{tpu_custom_call.1} parent=108 // loop_footer
                %s409 = sadd.s32 1, %s405
              $region115: #{tpu_custom_call.1} parent=108 // loop_footer_branch
                %404 = sbr.rel target = $region111
              $region116: #{tpu_custom_call.1} parent=108 // loop_exit
                _
            $region109: #{tpu_custom_call.1} parent=100 // pred_fallthru
              _
          $region101: #{tpu_custom_call.1} parent=96 // pred_fallthru
            _
          %440 = vnop
        $region97: #{tpu_custom_call.1} parent=51 // pred_fallthru
          _
      $region52: #{tpu_custom_call.1} parent=5 // pred_fallthru
        _
      %p441 = scmp.le.s32.totalorder 1, %s20
      %p442 = scmp.lt.s32.totalorder %s20, 3
      %p443 = pnand %p441, %p442
      %p444 = pneg %p443
      // Predicated region
      $region135: #{tpu_custom_call.1} parent=5 // pred_check
        _
      $region136: #{tpu_custom_call.1} parent=5 // pred_check_branch
        %446 = sbr.rel (%p443) target = $region138
      $region137: #{tpu_custom_call.1} parent=5 // pred_region
        %s447 = ssub.s32 %s20, 1
        %s448 = sand.u32 %s222, 1
        %s449 = sand.u32 %s222, 1
        %s450 = smul.addr %s449, 8
        %s451 = scalar_lea.vmem [#allocation2], %s450
        // Predicated region
        $region139: #{tpu_custom_call.1} parent=137 // pred_check
          %p452 = pneg %p235
        $region140: #{tpu_custom_call.1} parent=137 // pred_check_branch
          %454 = sbr.rel (%p452) target = $region142
        $region141: #{tpu_custom_call.1} parent=137 // pred_region
          _
        $region142: #{tpu_custom_call.1} parent=137 // pred_fallthru
          _
        %s455 = sand.u32 %s248, 1
        %s456 = sand.u32 %s248, 1
        %s457 = smul.addr %s456, 8
        %s458 = scalar_lea.vmem [#allocation3], %s457
        // Predicated region
        $region143: #{tpu_custom_call.1} parent=137 // pred_check
          %p459 = pneg %p261
        $region144: #{tpu_custom_call.1} parent=137 // pred_check_branch
          %461 = sbr.rel (%p459) target = $region146
        $region145: #{tpu_custom_call.1} parent=137 // pred_region
          _
        $region146: #{tpu_custom_call.1} parent=137 // pred_fallthru
          _
        %p462 = pneg %p41
        %p463 = pneg %p38
        %p464 = pneg %p62
        %p465 = pneg %p59
        %p466 = pneg %p83
        %p467 = pneg %p80
        %p468 = pneg %p104
        %p469 = pneg %p101
        %p470 = pneg %p125
        %p471 = pneg %p122
        %p472 = pneg %p146
        %p473 = pneg %p143
        %p474 = pneg %p167
        %p475 = pneg %p164
        %p476 = pneg %p188
        %p477 = pneg %p185
        %p478 = pneg %p209
        %p479 = pneg %p206
        %s480 = sand.u32 %s222, 1
        %s481 = sand.u32 %s222, 1
        %s482 = smul.addr %s481, 8
        %s483 = scalar_lea.vmem [#allocation2], %s482
        %p484 = pneg %p235
        %p485 = pneg %p232
        %s486 = sand.u32 %s248, 1
        %s487 = sand.u32 %s248, 1
        %s488 = smul.addr %s487, 8
        %s489 = scalar_lea.vmem [#allocation3], %s488
        %p490 = pneg %p261
        %p491 = pneg %p258
        %p492 = pneg %p287
        %p493 = pneg %p284
        %s494 = sand.u32 %s274, 1
        %s495 = scalar_lea.sflag [#allocation5], %s494
        %s496 = sand.u32 %s274, 1
        %s497 = scalar_lea.vmem [#allocation4], %s496
        %v498 = vld [vmem:[%s0] sm:$0xf]
        %v499 = vld [vmem:[%s0 + $0x4] sm:$0xf]
        %v500 = vunpack.c.l.bf16 %v498
        %v501 = vunpack.c.l.bf16 %v499
        %v502 = vld [vmem:[%s1] sm:$0xff]
        %v503 = vld [vmem:[%s1 + $0x8] sm:$0xff]
        %v504 = vld [vmem:[%s2] sm:$0xff]
        %v505 = vld [vmem:[%s2 + $0x8] sm:$0xff]
        %vm506 = vcmask 130048
        %v508 = vsel %vm506, %v500, 0
        %v511 = vsel %vm506, %v501, 0
        %513 = vmatprep.subr.mxu0 0.0
        %514 = vmatpush1.msra.mxu0 0.0
        %515 = vmatprep.subr.mxu0 0.0
        %516 = vmatpush1.msra.mxu0 0.0
        %517 = vmatprep.subr.mxu0 0.0
        %518 = vmatpush1.msra.mxu0 0.0
        %519 = vmatprep.subr.mxu0 0.0
        %520 = vmatpush1.msra.mxu0 0.0
        %521 = vmatprep.subr.mxu0 0.0
        %522 = vmatpush1.msra.mxu0 0.0
        %523 = vmatprep.subr.mxu0 0.0
        %524 = vmatpush1.msra.mxu0 0.0
        %525 = vmatprep.subr.mxu0 0.0
        %526 = vmatpush1.msra.mxu0 0.0
        %527 = vmatprep.subr.mxu0 0.0
        %528 = vmatpush1.msra.mxu0 0.0
        %529 = vmatprep.subr.mxu0 0.0
        %530 = vmatpush1.msra.mxu0 0.0
        %531 = vmatprep.subr.mxu0 0.0
        %532 = vmatpush1.msra.mxu0 0.0
        %533 = vmatprep.subr.mxu0 0.0
        %534 = vmatpush1.msra.mxu0 0.0
        %535 = vmatprep.subr.mxu0 0.0
        %536 = vmatpush1.msra.mxu0 0.0
        %537 = vmatprep.subr.mxu0 0.0
        %538 = vmatpush1.msra.mxu0 0.0
        %539 = vmatprep.subr.mxu0 0.0
        %540 = vmatpush1.msra.mxu0 0.0
        %541 = vmatprep.subr.mxu0 0.0
        %542 = vmatpush1.msra.mxu0 %v503
        %543 = vmatprep.subr.mxu0 0.0
        %544 = vmatpush1.msra.mxu0 %v502
        %545 = vmatprep.subr.mxu0 0.0
        %546 = vmatpush2.msra.mxu0 0.0
        %547 = vmatprep.subr.mxu0 0.0
        %548 = vmatpush2.msra.mxu0 0.0
        %549 = vmatprep.subr.mxu0 0.0
        %550 = vmatpush2.msra.mxu0 0.0
        %551 = vmatprep.subr.mxu0 0.0
        %552 = vmatpush2.msra.mxu0 0.0
        %553 = vmatprep.subr.mxu0 0.0
        %554 = vmatpush2.msra.mxu0 0.0
        %555 = vmatprep.subr.mxu0 0.0
        %556 = vmatpush2.msra.mxu0 0.0
        %557 = vmatprep.subr.mxu0 0.0
        %558 = vmatpush2.msra.mxu0 0.0
        %559 = vmatprep.subr.mxu0 0.0
        %560 = vmatpush2.msra.mxu0 0.0
        %561 = vmatprep.subr.mxu0 0.0
        %562 = vmatpush2.msra.mxu0 0.0
        %563 = vmatprep.subr.mxu0 0.0
        %564 = vmatpush2.msra.mxu0 0.0
        %565 = vmatprep.subr.mxu0 0.0
        %566 = vmatpush2.msra.mxu0 0.0
        %567 = vmatprep.subr.mxu0 0.0
        %568 = vmatpush2.msra.mxu0 0.0
        %569 = vmatprep.subr.mxu0 0.0
        %570 = vmatpush2.msra.mxu0 0.0
        %571 = vmatprep.subr.mxu0 0.0
        %572 = vmatpush2.msra.mxu0 0.0
        %573 = vmatprep.subr.mxu0 0.0
        %574 = vmatpush2.msra.mxu0 0.0
        %575 = vmatprep.subr.mxu0 0.0
        %576 = vmatpush2.msra.mxu0 0.0
        %577 = vmatprep.mubr.f32.mxu0 0.0
        %578 = vmatmul.mubr.f32.gmra.mxu0 %v508
        %v579 = vpop.f32.mrf.mxu0
        %v580 = vadd.f32 0.0, %v579
        %v581 = vpop.f32.mrf.mxu0
        %582 = vmatprep.mubr.f32.mxu0 0.0
        %583 = vmatmul.mubr.f32.gmra.mxu0 %v511
        %v584 = vpop.f32.mrf.mxu0
        %v585 = vadd.f32 0.0, %v584
        %v586 = vpop.f32.mrf.mxu0
        %587 = vdwg.mxu0
        %589 = vset.pattern.permute.xlu0 0
        %590 = vperm.xlu0 %589, %v504
        %v591 = vpop.permute.xlu0 %590
        %594 = vset.pattern.permute.xlu0 0
        %595 = vperm.xlu0 %594, %v505
        %v596 = vpop.permute.xlu0 %595
        %v598 = vmul.f32 %v591, %v580
        %v599 = vmul.f32 %v596, %v585
        %v600 = vld [vmem:[%s3] sm:$0xff]
        %v601 = vld [vmem:[%s4] sm:$0xff]
        %vm602 = vcmask 64512
        %v604 = vsel %vm602, %v598, 0
        %v607 = vsel %vm602, %v599, 0
        %609 = vmatprep.subr.mxu0 0.0
        %610 = vmatpush1.msra.mxu0 0.0
        %611 = vmatprep.subr.mxu0 0.0
        %612 = vmatpush1.msra.mxu0 0.0
        %613 = vmatprep.subr.mxu0 0.0
        %614 = vmatpush1.msra.mxu0 0.0
        %615 = vmatprep.subr.mxu0 0.0
        %616 = vmatpush1.msra.mxu0 0.0
        %617 = vmatprep.subr.mxu0 0.0
        %618 = vmatpush1.msra.mxu0 0.0
        %619 = vmatprep.subr.mxu0 0.0
        %620 = vmatpush1.msra.mxu0 0.0
        %621 = vmatprep.subr.mxu0 0.0
        %622 = vmatpush1.msra.mxu0 0.0
        %623 = vmatprep.subr.mxu0 0.0
        %624 = vmatpush1.msra.mxu0 0.0
        %625 = vmatprep.subr.mxu0 0.0
        %626 = vmatpush1.msra.mxu0 0.0
        %627 = vmatprep.subr.mxu0 0.0
        %628 = vmatpush1.msra.mxu0 0.0
        %629 = vmatprep.subr.mxu0 0.0
        %630 = vmatpush1.msra.mxu0 0.0
        %631 = vmatprep.subr.mxu0 0.0
        %632 = vmatpush1.msra.mxu0 0.0
        %633 = vmatprep.subr.mxu0 0.0
        %634 = vmatpush1.msra.mxu0 0.0
        %635 = vmatprep.subr.mxu0 0.0
        %636 = vmatpush1.msra.mxu0 0.0
        %637 = vmatprep.subr.mxu0 0.0
        %638 = vmatpush1.msra.mxu0 0.0
        %639 = vmatprep.subr.mxu0 0.0
        %640 = vmatpush1.msra.mxu0 %v601
        %641 = vmatprep.subr.mxu0 0.0
        %642 = vmatpush2.msra.mxu0 0.0
        %643 = vmatprep.subr.mxu0 0.0
        %644 = vmatpush2.msra.mxu0 0.0
        %645 = vmatprep.subr.mxu0 0.0
        %646 = vmatpush2.msra.mxu0 0.0
        %647 = vmatprep.subr.mxu0 0.0
        %648 = vmatpush2.msra.mxu0 0.0
        %649 = vmatprep.subr.mxu0 0.0
        %650 = vmatpush2.msra.mxu0 0.0
        %651 = vmatprep.subr.mxu0 0.0
        %652 = vmatpush2.msra.mxu0 0.0
        %653 = vmatprep.subr.mxu0 0.0
        %654 = vmatpush2.msra.mxu0 0.0
        %655 = vmatprep.subr.mxu0 0.0
        %656 = vmatpush2.msra.mxu0 0.0
        %657 = vmatprep.subr.mxu0 0.0
        %658 = vmatpush2.msra.mxu0 0.0
        %659 = vmatprep.subr.mxu0 0.0
        %660 = vmatpush2.msra.mxu0 0.0
        %661 = vmatprep.subr.mxu0 0.0
        %662 = vmatpush2.msra.mxu0 0.0
        %663 = vmatprep.subr.mxu0 0.0
        %664 = vmatpush2.msra.mxu0 0.0
        %665 = vmatprep.subr.mxu0 0.0
        %666 = vmatpush2.msra.mxu0 0.0
        %667 = vmatprep.subr.mxu0 0.0
        %668 = vmatpush2.msra.mxu0 0.0
        %669 = vmatprep.subr.mxu0 0.0
        %670 = vmatpush2.msra.mxu0 0.0
        %671 = vmatprep.subr.mxu0 0.0
        %672 = vmatpush2.msra.mxu0 0.0
        %673 = vmatprep.mubr.f32.mxu0 0.0
        %674 = vmatmul.mubr.f32.gmra.mxu0 %v604
        %v675 = vpop.f32.mrf.mxu0
        %v676 = vadd.f32 0.0, %v675
        %v677 = vpop.f32.mrf.mxu0
        %678 = vmatprep.mubr.f32.mxu0 0.0
        %679 = vmatmul.mubr.f32.gmra.mxu0 %v607
        %v680 = vpop.f32.mrf.mxu0
        %v681 = vadd.f32 0.0, %v680
        %v682 = vpop.f32.mrf.mxu0
        %683 = vdwg.mxu0
        %v685 = vsel %vm602, %v502, 0
        %v688 = vsel %vm602, %v503, 0
        %690 = vmatprep.subr.mxu0 0.0
        %691 = vmatpush1.msra.mxu0 0.0
        %692 = vmatprep.subr.mxu0 0.0
        %693 = vmatpush1.msra.mxu0 0.0
        %694 = vmatprep.subr.mxu0 0.0
        %695 = vmatpush1.msra.mxu0 0.0
        %696 = vmatprep.subr.mxu0 0.0
        %697 = vmatpush1.msra.mxu0 0.0
        %698 = vmatprep.subr.mxu0 0.0
        %699 = vmatpush1.msra.mxu0 0.0
        %700 = vmatprep.subr.mxu0 0.0
        %701 = vmatpush1.msra.mxu0 0.0
        %702 = vmatprep.subr.mxu0 0.0
        %703 = vmatpush1.msra.mxu0 0.0
        %704 = vmatprep.subr.mxu0 0.0
        %705 = vmatpush1.msra.mxu0 0.0
        %706 = vmatprep.subr.mxu0 0.0
        %707 = vmatpush1.msra.mxu0 0.0
        %708 = vmatprep.subr.mxu0 0.0
        %709 = vmatpush1.msra.mxu0 0.0
        %710 = vmatprep.subr.mxu0 0.0
        %711 = vmatpush1.msra.mxu0 0.0
        %712 = vmatprep.subr.mxu0 0.0
        %713 = vmatpush1.msra.mxu0 0.0
        %714 = vmatprep.subr.mxu0 0.0
        %715 = vmatpush1.msra.mxu0 0.0
        %716 = vmatprep.subr.mxu0 0.0
        %717 = vmatpush1.msra.mxu0 0.0
        %718 = vmatprep.subr.mxu0 0.0
        %719 = vmatpush1.msra.mxu0 0.0
        %720 = vmatprep.subr.mxu0 0.0
        %721 = vmatpush1.msra.mxu0 %v600
        %722 = vmatprep.subr.mxu0 0.0
        %723 = vmatpush2.msra.mxu0 0.0
        %724 = vmatprep.subr.mxu0 0.0
        %725 = vmatpush2.msra.mxu0 0.0
        %726 = vmatprep.subr.mxu0 0.0
        %727 = vmatpush2.msra.mxu0 0.0
        %728 = vmatprep.subr.mxu0 0.0
        %729 = vmatpush2.msra.mxu0 0.0
        %730 = vmatprep.subr.mxu0 0.0
        %731 = vmatpush2.msra.mxu0 0.0
        %732 = vmatprep.subr.mxu0 0.0
        %733 = vmatpush2.msra.mxu0 0.0
        %734 = vmatprep.subr.mxu0 0.0
        %735 = vmatpush2.msra.mxu0 0.0
        %736 = vmatprep.subr.mxu0 0.0
        %737 = vmatpush2.msra.mxu0 0.0
        %738 = vmatprep.subr.mxu0 0.0
        %739 = vmatpush2.msra.mxu0 0.0
        %740 = vmatprep.subr.mxu0 0.0
        %741 = vmatpush2.msra.mxu0 0.0
        %742 = vmatprep.subr.mxu0 0.0
        %743 = vmatpush2.msra.mxu0 0.0
        %744 = vmatprep.subr.mxu0 0.0
        %745 = vmatpush2.msra.mxu0 0.0
        %746 = vmatprep.subr.mxu0 0.0
        %747 = vmatpush2.msra.mxu0 0.0
        %748 = vmatprep.subr.mxu0 0.0
        %749 = vmatpush2.msra.mxu0 0.0
        %750 = vmatprep.subr.mxu0 0.0
        %751 = vmatpush2.msra.mxu0 0.0
        %752 = vmatprep.subr.mxu0 0.0
        %753 = vmatpush2.msra.mxu0 0.0
        %754 = vmatprep.mubr.f32.mxu0 0.0
        %755 = vmatmul.mubr.f32.gmra.mxu0 %v685
        %v756 = vpop.f32.mrf.mxu0
        %v757 = vadd.f32 %v676, %v756
        %v758 = vpop.f32.mrf.mxu0
        %759 = vmatprep.mubr.f32.mxu0 0.0
        %760 = vmatmul.mubr.f32.gmra.mxu0 %v688
        %v761 = vpop.f32.mrf.mxu0
        %v762 = vadd.f32 %v681, %v761
        %v763 = vpop.f32.mrf.mxu0
        %764 = vdwg.mxu0
        %v765 = vld [vmem:[%s5] sm:$0x1]
        %v767 = vlaneseq
        %v768 = vshrl.u32 %v767, 7
        %v769 = vsub.s32 0, %v768
        %v770 = vrot.slane %v765, %v769
        %v772 = vadd.f32 %v757, %v770
        %v773 = vadd.f32 %v762, %v770
        %v774 = vmax.f32 %v772, 0.0
        %v775 = vmax.f32 %v773, 0.0
        %v776 = vld [vmem:[%s7] sm:$0xff]
        %v777 = vld [vmem:[%s7 + $0x8] sm:$0xff]
        %v778 = vld [vmem:[%s7 + $0x10] sm:$0xff]
        %v779 = vld [vmem:[%s7 + $0x18] sm:$0xff]
        %vm780 = vcmask 261120
        %v782 = vsel %vm780, %v774, 0
        %v785 = vsel %vm780, %v775, 0
        %787 = vmatprep.subr.mxu0 0.0
        %788 = vmatpush1.msra.mxu0 0.0
        %789 = vmatprep.subr.mxu0 0.0
        %790 = vmatpush1.msra.mxu0 0.0
        %791 = vmatprep.subr.mxu0 0.0
        %792 = vmatpush1.msra.mxu0 0.0
        %793 = vmatprep.subr.mxu0 0.0
        %794 = vmatpush1.msra.mxu0 0.0
        %795 = vmatprep.subr.mxu0 0.0
        %796 = vmatpush1.msra.mxu0 0.0
        %797 = vmatprep.subr.mxu0 0.0
        %798 = vmatpush1.msra.mxu0 0.0
        %799 = vmatprep.subr.mxu0 0.0
        %800 = vmatpush1.msra.mxu0 0.0
        %801 = vmatprep.subr.mxu0 0.0
        %802 = vmatpush1.msra.mxu0 0.0
        %803 = vmatprep.subr.mxu0 0.0
        %804 = vmatpush1.msra.mxu0 0.0
        %805 = vmatprep.subr.mxu0 0.0
        %806 = vmatpush1.msra.mxu0 0.0
        %807 = vmatprep.subr.mxu0 0.0
        %808 = vmatpush1.msra.mxu0 0.0
        %809 = vmatprep.subr.mxu0 0.0
        %810 = vmatpush1.msra.mxu0 0.0
        %811 = vmatprep.subr.mxu0 0.0
        %812 = vmatpush1.msra.mxu0 %v779
        %813 = vmatprep.subr.mxu0 0.0
        %814 = vmatpush1.msra.mxu0 %v778
        %815 = vmatprep.subr.mxu0 0.0
        %816 = vmatpush1.msra.mxu0 %v777
        %817 = vmatprep.subr.mxu0 0.0
        %818 = vmatpush1.msra.mxu0 %v776
        %819 = vmatprep.subr.mxu0 0.0
        %820 = vmatpush2.msra.mxu0 0.0
        %821 = vmatprep.subr.mxu0 0.0
        %822 = vmatpush2.msra.mxu0 0.0
        %823 = vmatprep.subr.mxu0 0.0
        %824 = vmatpush2.msra.mxu0 0.0
        %825 = vmatprep.subr.mxu0 0.0
        %826 = vmatpush2.msra.mxu0 0.0
        %827 = vmatprep.subr.mxu0 0.0
        %828 = vmatpush2.msra.mxu0 0.0
        %829 = vmatprep.subr.mxu0 0.0
        %830 = vmatpush2.msra.mxu0 0.0
        %831 = vmatprep.subr.mxu0 0.0
        %832 = vmatpush2.msra.mxu0 0.0
        %833 = vmatprep.subr.mxu0 0.0
        %834 = vmatpush2.msra.mxu0 0.0
        %835 = vmatprep.subr.mxu0 0.0
        %836 = vmatpush2.msra.mxu0 0.0
        %837 = vmatprep.subr.mxu0 0.0
        %838 = vmatpush2.msra.mxu0 0.0
        %839 = vmatprep.subr.mxu0 0.0
        %840 = vmatpush2.msra.mxu0 0.0
        %841 = vmatprep.subr.mxu0 0.0
        %842 = vmatpush2.msra.mxu0 0.0
        %843 = vmatprep.subr.mxu0 0.0
        %844 = vmatpush2.msra.mxu0 0.0
        %845 = vmatprep.subr.mxu0 0.0
        %846 = vmatpush2.msra.mxu0 0.0
        %847 = vmatprep.subr.mxu0 0.0
        %848 = vmatpush2.msra.mxu0 0.0
        %849 = vmatprep.subr.mxu0 0.0
        %850 = vmatpush2.msra.mxu0 0.0
        %851 = vmatprep.mubr.f32.mxu0 0.0
        %852 = vmatmul.mubr.f32.gmra.mxu0 %v782
        %v853 = vpop.f32.mrf.mxu0
        %v854 = vadd.f32 0.0, %v853
        %v855 = vpop.f32.mrf.mxu0
        %856 = vmatprep.mubr.f32.mxu0 0.0
        %857 = vmatmul.mubr.f32.gmra.mxu0 %v785
        %v858 = vpop.f32.mrf.mxu0
        %v859 = vadd.f32 0.0, %v858
        %v860 = vpop.f32.mrf.mxu0
        %861 = vdwg.mxu0
        %v862 = vld [vmem:[%s6] sm:$0xff]
        %v863 = vld [vmem:[%s6 + $0x8] sm:$0xff]
        %v864 = vld [vmem:[%s6 + $0x10] sm:$0xff]
        %v865 = vld [vmem:[%s6 + $0x18] sm:$0xff]
        %866 = vmatprep.subr.mxu0 0.0
        %867 = vmatpush1.msra.mxu0 0.0
        %868 = vmatprep.subr.mxu0 0.0
        %869 = vmatpush1.msra.mxu0 0.0
        %870 = vmatprep.subr.mxu0 0.0
        %871 = vmatpush1.msra.mxu0 0.0
        %872 = vmatprep.subr.mxu0 0.0
        %873 = vmatpush1.msra.mxu0 0.0
        %874 = vmatprep.subr.mxu0 0.0
        %875 = vmatpush1.msra.mxu0 0.0
        %876 = vmatprep.subr.mxu0 0.0
        %877 = vmatpush1.msra.mxu0 0.0
        %878 = vmatprep.subr.mxu0 0.0
        %879 = vmatpush1.msra.mxu0 0.0
        %880 = vmatprep.subr.mxu0 0.0
        %881 = vmatpush1.msra.mxu0 0.0
        %882 = vmatprep.subr.mxu0 0.0
        %883 = vmatpush1.msra.mxu0 0.0
        %884 = vmatprep.subr.mxu0 0.0
        %885 = vmatpush1.msra.mxu0 0.0
        %886 = vmatprep.subr.mxu0 0.0
        %887 = vmatpush1.msra.mxu0 0.0
        %888 = vmatprep.subr.mxu0 0.0
        %889 = vmatpush1.msra.mxu0 0.0
        %890 = vmatprep.subr.mxu0 0.0
        %891 = vmatpush1.msra.mxu0 0.0
        %892 = vmatprep.subr.mxu0 0.0
        %893 = vmatpush1.msra.mxu0 0.0
        %894 = vmatprep.subr.mxu0 0.0
        %895 = vmatpush1.msra.mxu0 %v859
        %896 = vmatprep.subr.mxu0 0.0
        %897 = vmatpush1.msra.mxu0 %v854
        %898 = vmatprep.subr.mxu0 0.0
        %899 = vmatpush2.msra.mxu0 0.0
        %900 = vmatprep.subr.mxu0 0.0
        %901 = vmatpush2.msra.mxu0 0.0
        %902 = vmatprep.subr.mxu0 0.0
        %903 = vmatpush2.msra.mxu0 0.0
        %904 = vmatprep.subr.mxu0 0.0
        %905 = vmatpush2.msra.mxu0 0.0
        %906 = vmatprep.subr.mxu0 0.0
        %907 = vmatpush2.msra.mxu0 0.0
        %908 = vmatprep.subr.mxu0 0.0
        %909 = vmatpush2.msra.mxu0 0.0
        %910 = vmatprep.subr.mxu0 0.0
        %911 = vmatpush2.msra.mxu0 0.0
        %912 = vmatprep.subr.mxu0 0.0
        %913 = vmatpush2.msra.mxu0 0.0
        %914 = vmatprep.subr.mxu0 0.0
        %915 = vmatpush2.msra.mxu0 0.0
        %916 = vmatprep.subr.mxu0 0.0
        %917 = vmatpush2.msra.mxu0 0.0
        %918 = vmatprep.subr.mxu0 0.0
        %919 = vmatpush2.msra.mxu0 0.0
        %920 = vmatprep.subr.mxu0 0.0
        %921 = vmatpush2.msra.mxu0 0.0
        %922 = vmatprep.subr.mxu0 0.0
        %923 = vmatpush2.msra.mxu0 0.0
        %924 = vmatprep.subr.mxu0 0.0
        %925 = vmatpush2.msra.mxu0 0.0
        %926 = vmatprep.subr.mxu0 0.0
        %927 = vmatpush2.msra.mxu0 0.0
        %928 = vmatprep.subr.mxu0 0.0
        %929 = vmatpush2.msra.mxu0 0.0
        %930 = vmatprep.mubr.f32.mxu0 0.0
        %931 = vmatmul.mubr.f32.gmra.mxu0 %v508
        %v932 = vpop.f32.mrf.mxu0
        %v933 = vadd.f32 0.0, %v932
        %v934 = vpop.f32.mrf.mxu0
        %935 = vmatprep.mubr.f32.mxu0 0.0
        %936 = vmatmul.mubr.f32.gmra.mxu0 %v511
        %v937 = vpop.f32.mrf.mxu0
        %v938 = vadd.f32 0.0, %v937
        %v939 = vpop.f32.mrf.mxu0
        %940 = vdwg.mxu0
        %v941 = vmul.f32 %v591, %v933
        %v942 = vmul.f32 %v596, %v938
        %943 = vmatprep.subr.mxu0 0.0
        %944 = vmatpush1.msra.mxu0 0.0
        %945 = vmatprep.subr.mxu0 0.0
        %946 = vmatpush1.msra.mxu0 0.0
        %947 = vmatprep.subr.mxu0 0.0
        %948 = vmatpush1.msra.mxu0 0.0
        %949 = vmatprep.subr.mxu0 0.0
        %950 = vmatpush1.msra.mxu0 0.0
        %951 = vmatprep.subr.mxu0 0.0
        %952 = vmatpush1.msra.mxu0 0.0
        %953 = vmatprep.subr.mxu0 0.0
        %954 = vmatpush1.msra.mxu0 0.0
        %955 = vmatprep.subr.mxu0 0.0
        %956 = vmatpush1.msra.mxu0 0.0
        %957 = vmatprep.subr.mxu0 0.0
        %958 = vmatpush1.msra.mxu0 0.0
        %959 = vmatprep.subr.mxu0 0.0
        %960 = vmatpush1.msra.mxu0 0.0
        %961 = vmatprep.subr.mxu0 0.0
        %962 = vmatpush1.msra.mxu0 0.0
        %963 = vmatprep.subr.mxu0 0.0
        %964 = vmatpush1.msra.mxu0 0.0
        %965 = vmatprep.subr.mxu0 0.0
        %966 = vmatpush1.msra.mxu0 0.0
        %967 = vmatprep.subr.mxu0 0.0
        %968 = vmatpush1.msra.mxu0 %v865
        %969 = vmatprep.subr.mxu0 0.0
        %970 = vmatpush1.msra.mxu0 %v864
        %971 = vmatprep.subr.mxu0 0.0
        %972 = vmatpush1.msra.mxu0 %v863
        %973 = vmatprep.subr.mxu0 0.0
        %974 = vmatpush1.msra.mxu0 %v862
        %975 = vmatprep.subr.mxu0 0.0
        %976 = vmatpush2.msra.mxu0 0.0
        %977 = vmatprep.subr.mxu0 0.0
        %978 = vmatpush2.msra.mxu0 0.0
        %979 = vmatprep.subr.mxu0 0.0
        %980 = vmatpush2.msra.mxu0 0.0
        %981 = vmatprep.subr.mxu0 0.0
        %982 = vmatpush2.msra.mxu0 0.0
        %983 = vmatprep.subr.mxu0 0.0
        %984 = vmatpush2.msra.mxu0 0.0
        %985 = vmatprep.subr.mxu0 0.0
        %986 = vmatpush2.msra.mxu0 0.0
        %987 = vmatprep.subr.mxu0 0.0
        %988 = vmatpush2.msra.mxu0 0.0
        %989 = vmatprep.subr.mxu0 0.0
        %990 = vmatpush2.msra.mxu0 0.0
        %991 = vmatprep.subr.mxu0 0.0
        %992 = vmatpush2.msra.mxu0 0.0
        %993 = vmatprep.subr.mxu0 0.0
        %994 = vmatpush2.msra.mxu0 0.0
        %995 = vmatprep.subr.mxu0 0.0
        %996 = vmatpush2.msra.mxu0 0.0
        %997 = vmatprep.subr.mxu0 0.0
        %998 = vmatpush2.msra.mxu0 0.0
        %999 = vmatprep.subr.mxu0 0.0
        %1000 = vmatpush2.msra.mxu0 0.0
        %1001 = vmatprep.subr.mxu0 0.0
        %1002 = vmatpush2.msra.mxu0 0.0
        %1003 = vmatprep.subr.mxu0 0.0
        %1004 = vmatpush2.msra.mxu0 0.0
        %1005 = vmatprep.subr.mxu0 0.0
        %1006 = vmatpush2.msra.mxu0 0.0
        %1007 = vmatprep.mubr.f32.mxu0 0.0
        %1008 = vmatmul.mubr.f32.gmra.mxu0 %v782
        %v1009 = vpop.f32.mrf.mxu0
        %v1010 = vadd.f32 %v941, %v1009
        %v1011 = vpop.f32.mrf.mxu0
        %1012 = vmatprep.mubr.f32.mxu0 0.0
        %1013 = vmatmul.mubr.f32.gmra.mxu0 %v785
        %v1014 = vpop.f32.mrf.mxu0
        %v1015 = vadd.f32 %v942, %v1014
        %v1016 = vpop.f32.mrf.mxu0
        %1017 = vdwg.mxu0
        %v1018 = vld [vmem:[%s8] sm:$0x1]
        %v1020 = vlaneseq
        %v1021 = vshrl.u32 %v1020, 7
        %v1022 = vsub.s32 0, %v1021
        %v1023 = vrot.slane %v1018, %v1022
        %v1025 = vadd.f32 %v1010, %v1023
        %v1026 = vadd.f32 %v1015, %v1023
        %v1028 = vsel %vm506, %v1025, 0
        %v1031 = vsel %vm506, %v1026, 0
        %1033 = vmatprep.subr.mxu0 0.0
        %1034 = vmatpush1.xpose.msra.mxu0 0.0
        %1035 = vmatprep.subr.mxu0 0.0
        %1036 = vmatpush1.xpose.msra.mxu0 0.0
        %1037 = vmatprep.subr.mxu0 0.0
        %1038 = vmatpush1.xpose.msra.mxu0 0.0
        %1039 = vmatprep.subr.mxu0 0.0
        %1040 = vmatpush1.xpose.msra.mxu0 0.0
        %1041 = vmatprep.subr.mxu0 0.0
        %1042 = vmatpush1.xpose.msra.mxu0 0.0
        %1043 = vmatprep.subr.mxu0 0.0
        %1044 = vmatpush1.xpose.msra.mxu0 0.0
        %1045 = vmatprep.subr.mxu0 0.0
        %1046 = vmatpush1.xpose.msra.mxu0 0.0
        %1047 = vmatprep.subr.mxu0 0.0
        %1048 = vmatpush1.xpose.msra.mxu0 0.0
        %1049 = vmatprep.subr.mxu0 0.0
        %1050 = vmatpush1.xpose.msra.mxu0 0.0
        %1051 = vmatprep.subr.mxu0 0.0
        %1052 = vmatpush1.xpose.msra.mxu0 0.0
        %1053 = vmatprep.subr.mxu0 0.0
        %1054 = vmatpush1.xpose.msra.mxu0 0.0
        %1055 = vmatprep.subr.mxu0 0.0
        %1056 = vmatpush1.xpose.msra.mxu0 0.0
        %1057 = vmatprep.subr.mxu0 0.0
        %1058 = vmatpush1.xpose.msra.mxu0 0.0
        %1059 = vmatprep.subr.mxu0 0.0
        %1060 = vmatpush1.xpose.msra.mxu0 0.0
        %1061 = vmatprep.subr.mxu0 0.0
        %1062 = vmatpush1.xpose.msra.mxu0 %v1031
        %1063 = vmatprep.subr.mxu0 0.0
        %1064 = vmatpush1.xpose.msra.mxu0 %v1028
        %1065 = vmatprep.subr.mxu0 0.0
        %1066 = vmatpush2.xpose.msra.mxu0 0.0
        %1067 = vmatprep.subr.mxu0 0.0
        %1068 = vmatpush2.xpose.msra.mxu0 0.0
        %1069 = vmatprep.subr.mxu0 0.0
        %1070 = vmatpush2.xpose.msra.mxu0 0.0
        %1071 = vmatprep.subr.mxu0 0.0
        %1072 = vmatpush2.xpose.msra.mxu0 0.0
        %1073 = vmatprep.subr.mxu0 0.0
        %1074 = vmatpush2.xpose.msra.mxu0 0.0
        %1075 = vmatprep.subr.mxu0 0.0
        %1076 = vmatpush2.xpose.msra.mxu0 0.0
        %1077 = vmatprep.subr.mxu0 0.0
        %1078 = vmatpush2.xpose.msra.mxu0 0.0
        %1079 = vmatprep.subr.mxu0 0.0
        %1080 = vmatpush2.xpose.msra.mxu0 0.0
        %1081 = vmatprep.subr.mxu0 0.0
        %1082 = vmatpush2.xpose.msra.mxu0 0.0
        %1083 = vmatprep.subr.mxu0 0.0
        %1084 = vmatpush2.xpose.msra.mxu0 0.0
        %1085 = vmatprep.subr.mxu0 0.0
        %1086 = vmatpush2.xpose.msra.mxu0 0.0
        %1087 = vmatprep.subr.mxu0 0.0
        %1088 = vmatpush2.xpose.msra.mxu0 0.0
        %1089 = vmatprep.subr.mxu0 0.0
        %1090 = vmatpush2.xpose.msra.mxu0 0.0
        %1091 = vmatprep.subr.mxu0 0.0
        %1092 = vmatpush2.xpose.msra.mxu0 0.0
        %1093 = vmatprep.subr.mxu0 0.0
        %1094 = vmatpush2.xpose.msra.mxu0 0.0
        %1095 = vmatprep.subr.mxu0 0.0
        %1096 = vmatpush2.xpose.msra.mxu0 0.0
        %1097 = vmatprep.mubr.f32.mxu0 0.0
        %1098 = vmatmul.mubr.f32.gmra.mxu0 %v1028
        %v1099 = vpop.f32.mrf.mxu0
        %v1100 = vadd.f32 0.0, %v1099
        %v1101 = vpop.f32.mrf.mxu0
        %1102 = vmatprep.mubr.f32.mxu0 0.0
        %1103 = vmatmul.mubr.f32.gmra.mxu0 %v1031
        %v1104 = vpop.f32.mrf.mxu0
        %v1105 = vadd.f32 0.0, %v1104
        %v1106 = vpop.f32.mrf.mxu0
        %1107 = vdwg.mxu0
        %v1108 = vld [vmem:[%s451] sm:$0xf]
        %v1109 = vld [vmem:[%s451 + $0x4] sm:$0xf]
        %v1110 = vunpack.c.l.bf16 %v1108
        %v1111 = vunpack.c.l.bf16 %v1109
        %v1112 = vld [vmem:[%s458] sm:$0xf]
        %v1113 = vld [vmem:[%s458 + $0x4] sm:$0xf]
        %v1114 = vunpack.c.l.bf16 %v1112
        %v1115 = vunpack.c.l.bf16 %v1113
        %v1117 = vsel %vm506, %v1100, 0
        %v1120 = vsel %vm506, %v1105, 0
        %1122 = vmatprep.subr.mxu0 0.0
        %1123 = vmatpush1.msra.mxu0 0.0
        %1124 = vmatprep.subr.mxu0 0.0
        %1125 = vmatpush1.msra.mxu0 0.0
        %1126 = vmatprep.subr.mxu0 0.0
        %1127 = vmatpush1.msra.mxu0 0.0
        %1128 = vmatprep.subr.mxu0 0.0
        %1129 = vmatpush1.msra.mxu0 0.0
        %1130 = vmatprep.subr.mxu0 0.0
        %1131 = vmatpush1.msra.mxu0 0.0
        %1132 = vmatprep.subr.mxu0 0.0
        %1133 = vmatpush1.msra.mxu0 0.0
        %1134 = vmatprep.subr.mxu0 0.0
        %1135 = vmatpush1.msra.mxu0 0.0
        %1136 = vmatprep.subr.mxu0 0.0
        %1137 = vmatpush1.msra.mxu0 0.0
        %1138 = vmatprep.subr.mxu0 0.0
        %1139 = vmatpush1.msra.mxu0 0.0
        %1140 = vmatprep.subr.mxu0 0.0
        %1141 = vmatpush1.msra.mxu0 0.0
        %1142 = vmatprep.subr.mxu0 0.0
        %1143 = vmatpush1.msra.mxu0 0.0
        %1144 = vmatprep.subr.mxu0 0.0
        %1145 = vmatpush1.msra.mxu0 0.0
        %1146 = vmatprep.subr.mxu0 0.0
        %1147 = vmatpush1.msra.mxu0 0.0
        %1148 = vmatprep.subr.mxu0 0.0
        %1149 = vmatpush1.msra.mxu0 0.0
        %1150 = vmatprep.subr.mxu0 0.0
        %1151 = vmatpush1.msra.mxu0 %v1115
        %1152 = vmatprep.subr.mxu0 0.0
        %1153 = vmatpush1.msra.mxu0 %v1114
        %1154 = vmatprep.subr.mxu0 0.0
        %1155 = vmatpush2.msra.mxu0 0.0
        %1156 = vmatprep.subr.mxu0 0.0
        %1157 = vmatpush2.msra.mxu0 0.0
        %1158 = vmatprep.subr.mxu0 0.0
        %1159 = vmatpush2.msra.mxu0 0.0
        %1160 = vmatprep.subr.mxu0 0.0
        %1161 = vmatpush2.msra.mxu0 0.0
        %1162 = vmatprep.subr.mxu0 0.0
        %1163 = vmatpush2.msra.mxu0 0.0
        %1164 = vmatprep.subr.mxu0 0.0
        %1165 = vmatpush2.msra.mxu0 0.0
        %1166 = vmatprep.subr.mxu0 0.0
        %1167 = vmatpush2.msra.mxu0 0.0
        %1168 = vmatprep.subr.mxu0 0.0
        %1169 = vmatpush2.msra.mxu0 0.0
        %1170 = vmatprep.subr.mxu0 0.0
        %1171 = vmatpush2.msra.mxu0 0.0
        %1172 = vmatprep.subr.mxu0 0.0
        %1173 = vmatpush2.msra.mxu0 0.0
        %1174 = vmatprep.subr.mxu0 0.0
        %1175 = vmatpush2.msra.mxu0 0.0
        %1176 = vmatprep.subr.mxu0 0.0
        %1177 = vmatpush2.msra.mxu0 0.0
        %1178 = vmatprep.subr.mxu0 0.0
        %1179 = vmatpush2.msra.mxu0 0.0
        %1180 = vmatprep.subr.mxu0 0.0
        %1181 = vmatpush2.msra.mxu0 0.0
        %1182 = vmatprep.subr.mxu0 0.0
        %1183 = vmatpush2.msra.mxu0 0.0
        %1184 = vmatprep.subr.mxu0 0.0
        %1185 = vmatpush2.msra.mxu0 0.0
        %1186 = vmatprep.mubr.f32.mxu0 0.0
        %1187 = vmatmul.mubr.f32.gmra.mxu0 %v1117
        %v1188 = vpop.f32.mrf.mxu0
        %v1189 = vadd.f32 0.0, %v1188
        %v1190 = vpop.f32.mrf.mxu0
        %1191 = vmatprep.mubr.f32.mxu0 0.0
        %1192 = vmatmul.mubr.f32.gmra.mxu0 %v1120
        %v1193 = vpop.f32.mrf.mxu0
        %v1194 = vadd.f32 0.0, %v1193
        %v1195 = vpop.f32.mrf.mxu0
        %1196 = vdwg.mxu0
        %v1197 = vmul.f32 %v1110, %v1189
        %v1198 = vmul.f32 %v1111, %v1194
        %v1200 = vsel %vm506, 1.0, 0
        %1202 = vmatprep.subr.mxu0 0.0
        %1203 = vmatpush1.msra.mxu0 0.0
        %1204 = vmatprep.subr.mxu0 0.0
        %1205 = vmatpush1.msra.mxu0 0.0
        %1206 = vmatprep.subr.mxu0 0.0
        %1207 = vmatpush1.msra.mxu0 0.0
        %1208 = vmatprep.subr.mxu0 0.0
        %1209 = vmatpush1.msra.mxu0 0.0
        %1210 = vmatprep.subr.mxu0 0.0
        %1211 = vmatpush1.msra.mxu0 0.0
        %1212 = vmatprep.subr.mxu0 0.0
        %1213 = vmatpush1.msra.mxu0 0.0
        %1214 = vmatprep.subr.mxu0 0.0
        %1215 = vmatpush1.msra.mxu0 0.0
        %1216 = vmatprep.subr.mxu0 0.0
        %1217 = vmatpush1.msra.mxu0 0.0
        %1218 = vmatprep.subr.mxu0 0.0
        %1219 = vmatpush1.msra.mxu0 0.0
        %1220 = vmatprep.subr.mxu0 0.0
        %1221 = vmatpush1.msra.mxu0 0.0
        %1222 = vmatprep.subr.mxu0 0.0
        %1223 = vmatpush1.msra.mxu0 0.0
        %1224 = vmatprep.subr.mxu0 0.0
        %1225 = vmatpush1.msra.mxu0 0.0
        %1226 = vmatprep.subr.mxu0 0.0
        %1227 = vmatpush1.msra.mxu0 0.0
        %1228 = vmatprep.subr.mxu0 0.0
        %1229 = vmatpush1.msra.mxu0 0.0
        %1230 = vmatprep.subr.mxu0 0.0
        %1231 = vmatpush1.msra.mxu0 %v1198
        %1232 = vmatprep.subr.mxu0 0.0
        %1233 = vmatpush1.msra.mxu0 %v1197
        %1234 = vmatprep.subr.mxu0 0.0
        %1235 = vmatpush2.msra.mxu0 0.0
        %1236 = vmatprep.subr.mxu0 0.0
        %1237 = vmatpush2.msra.mxu0 0.0
        %1238 = vmatprep.subr.mxu0 0.0
        %1239 = vmatpush2.msra.mxu0 0.0
        %1240 = vmatprep.subr.mxu0 0.0
        %1241 = vmatpush2.msra.mxu0 0.0
        %1242 = vmatprep.subr.mxu0 0.0
        %1243 = vmatpush2.msra.mxu0 0.0
        %1244 = vmatprep.subr.mxu0 0.0
        %1245 = vmatpush2.msra.mxu0 0.0
        %1246 = vmatprep.subr.mxu0 0.0
        %1247 = vmatpush2.msra.mxu0 0.0
        %1248 = vmatprep.subr.mxu0 0.0
        %1249 = vmatpush2.msra.mxu0 0.0
        %1250 = vmatprep.subr.mxu0 0.0
        %1251 = vmatpush2.msra.mxu0 0.0
        %1252 = vmatprep.subr.mxu0 0.0
        %1253 = vmatpush2.msra.mxu0 0.0
        %1254 = vmatprep.subr.mxu0 0.0
        %1255 = vmatpush2.msra.mxu0 0.0
        %1256 = vmatprep.subr.mxu0 0.0
        %1257 = vmatpush2.msra.mxu0 0.0
        %1258 = vmatprep.subr.mxu0 0.0
        %1259 = vmatpush2.msra.mxu0 0.0
        %1260 = vmatprep.subr.mxu0 0.0
        %1261 = vmatpush2.msra.mxu0 0.0
        %1262 = vmatprep.subr.mxu0 0.0
        %1263 = vmatpush2.msra.mxu0 0.0
        %1264 = vmatprep.subr.mxu0 0.0
        %1265 = vmatpush2.msra.mxu0 0.0
        %1266 = vmatprep.mubr.f32.mxu0 0.0
        %1267 = vmatmul.mubr.f32.gmra.mxu0 %v1200
        %v1268 = vpop.f32.mrf.mxu0
        %v1269 = vadd.f32 0.0, %v1268
        %v1270 = vpop.f32.mrf.mxu0
        %1271 = vdwg.mxu0
        %1272 = vst [vmem:[%s497] sm:$0x1] %v1269
        %s1273 = sand.u32 %s274, 1
        %s1274 = scalar_lea.sflag [#allocation5], %s1273
        %s1275 = sand.u32 %s274, 1
        %s1276 = scalar_lea.vmem [#allocation4], %s1275
        // Predicated region
        $region147: #{tpu_custom_call.1} parent=137 // pred_check
          %p1277 = pneg %p284
        $region148: #{tpu_custom_call.1} parent=137 // pred_check_branch
          %1279 = sbr.rel (%p1277) target = $region150
        $region149: #{tpu_custom_call.1} parent=137 // pred_region
          %s1281 = ssub.s32 16, 16
          %1282 = vsyncadd %s1274, %s1281
          %s1283 = smul.addr %s25, 16
          %s1284 = scalar_lea.hbm %s11, %s1283
          %s1286 = sshll.u32 %s1276, 4
          %s1287 = int_to_ptr.vmem [resolvable:$true] %s1286
          %1289 = dma.vmem_to_hbm [thread:$0]  %s1287, 16, %s1284, %s1274
        $region150: #{tpu_custom_call.1} parent=137 // pred_fallthru
          _
      $region138: #{tpu_custom_call.1} parent=5 // pred_fallthru
        _
      %p1290 = scmp.le.s32.totalorder 2, %s20
      // Predicated region
      $region151: #{tpu_custom_call.1} parent=5 // pred_check
        %p1291 = pneg %p1290
      $region152: #{tpu_custom_call.1} parent=5 // pred_check_branch
        %1293 = sbr.rel (%p1291) target = $region154
      $region153: #{tpu_custom_call.1} parent=5 // pred_region
        %s1294 = ssub.s32 %s20, 2
        // Predicated region
        $region155: #{tpu_custom_call.1} parent=153 // pred_check
          %p1295 = pneg %p290
        $region156: #{tpu_custom_call.1} parent=153 // pred_check_branch
          %1297 = sbr.rel (%p1295) target = $region158
        $region157: #{tpu_custom_call.1} parent=153 // pred_region
          %s1298 = sand.u32 %s275, 1
          %s1299 = scalar_lea.sflag [#allocation5], %s1298
          %s1300 = sand.u32 %s275, 1
          %s1301 = scalar_lea.vmem [#allocation4], %s1300
          %1302 = dma.done %s1299, 16
        $region158: #{tpu_custom_call.1} parent=153 // pred_fallthru
          _
      $region154: #{tpu_custom_call.1} parent=5 // pred_fallthru
        _
    $region6: #{tpu_custom_call.1} parent=1 // loop_footer
      %s24 = sadd.s32 1, %s20
    $region7: #{tpu_custom_call.1} parent=1 // loop_footer_branch
      %19 = sbr.rel target = $region3
    $region8: #{tpu_custom_call.1} parent=1 // loop_exit
      _
    %1303 = vsyncpa [#allocation5], 1
    %s1304 = scalar_lea.sflag [#allocation5], 1
    %1305 = vsyncpa %s1304, 1

</llo_original>
